<compile_context>
chip_gen: v7x
topology: tpu7x:2x2x1
jax: 0.10.0
libtpu: 0.0.40
codegen_flags: <defaults>
</compile_context>

<pallas_src>
from collections import namedtuple
from functools import partial

import jax
import jax.numpy as jnp
from jax import lax
from jax.experimental import pallas as pl
from jax.experimental.pallas import tpu as pltpu

VggOutputs = namedtuple("VggOutputs",
                        ["relu1_2", "relu2_2", "relu3_3", "relu4_3", "relu5_3"])

# (in_channels, out_channels) of the 13 conv layers in torchvision vgg16.features
_VGG16_CONV_CFG = [
    (3, 64), (64, 64),
    (64, 128), (128, 128),
    (128, 256), (256, 256), (256, 256),
    (256, 512), (512, 512), (512, 512),
    (512, 512), (512, 512), (512, 512),
]

_TCO_MAX = 256          # out-channel tile: >=2 Co tiles on 512-ch layers (v7x: 2 TCs)
_CHUNK_ROWS = 2048      # target M (GEMM rows) per in-kernel row chunk
_POOL_TILE_BYTES = 2 << 20


def _largest_divisor(n, cap):
    cap = max(1, min(n, cap))
    for d in range(cap, 0, -1):
        if n % d == 0:
            return d
    return 1


def _pad8(v):
    return -(-v // 8) * 8


def _pad128(v):
    return -(-v // 128) * 128


def _vmem_limit_bytes(needed):
    # Generation-aware cap: leave headroom below physical VMEM for Mosaic scratch.
    try:
        phys = int(pltpu.get_tpu_info().vmem_capacity_bytes)
    except Exception:
        phys = 64 << 20                      # assume the smallest (v7x) if unknown
    cap = (phys * 3) // 4                    # 48 MiB on v7x, 96 MiB on v5e/v6e
    limit = int(needed * 1.4) + (6 << 20)
    return min(max(limit, 32 << 20), cap)


def init_vgg16_params(key):
    """Deterministic He-style init.  Weights HWIO (== torch OIHW.permute(2,3,1,0))."""
    params = []
    for i, (ci, co) in enumerate(_VGG16_CONV_CFG):
        kw, kb = jax.random.split(jax.random.fold_in(key, i))
        std = (2.0 / (9.0 * ci)) ** 0.5
        w = std * jax.random.normal(kw, (3, 3, ci, co), jnp.float32)
        b = 0.01 * jax.random.normal(kb, (co,), jnp.float32)
        params.append((w, b))
    return params


# ----------------------------- conv3x3 + bias + ReLU ---------------------------------
def _make_conv_kernel(H, W, Ci, tco, TH, n_chunks):
    def kernel(x_ref, w_ref, b_ref, o_ref, xp_ref):
        # x_ref : (1, H, W, Ci) bf16        w_ref : (3, 3, Ci, tco) bf16
        # b_ref : (1, tco) f32              o_ref : (1, H, W, tco)
        # xp_ref: (H+2, W+2, Ci) bf16 scratch -- zero-padded copy of this image.
        dt = x_ref.dtype
        # Build the padded image in VMEM (halo borders + shifted body copy).  Rebuilt
        # unconditionally every grid step so it is correct under any core sharding.
        xp_ref[0:1, :, :] = jnp.zeros((1, W + 2, Ci), dt)
        xp_ref[H + 1:H + 2, :, :] = jnp.zeros((1, W + 2, Ci), dt)
        xp_ref[:, 0:1, :] = jnp.zeros((H + 2, 1, Ci), dt)
        xp_ref[:, W + 1:W + 2, :] = jnp.zeros((H + 2, 1, Ci), dt)
        xp_ref[1:H + 1, 1:W + 1, :] = x_ref[0]

        bias = b_ref[...]                                    # (1, tco) f32

        def chunk(r):
            row0 = r * TH                                    # first output row of chunk
            acc = jnp.zeros((TH * W, tco), jnp.float32)
            for dh in range(3):                              # 9 taps, K = Ci each,
                for dw in range(3):                          # full-K f32 value acc
                    lhs = xp_ref[pl.ds(row0 + dh, TH), dw:dw + W, :]
                    acc = acc + jnp.dot(lhs.reshape(TH * W, Ci), w_ref[dh, dw],
                                        preferred_element_type=jnp.float32)
            out = jnp.maximum(acc + bias, 0.0).astype(o_ref.dtype)
            o_ref[0, pl.ds(row0, TH), :, :] = out.reshape(TH, W, tco)

        if n_chunks == 1:
            chunk(0)
        else:
            def body(r, carry):
                chunk(r)
                return carry
            lax.fori_loop(0, n_chunks, body, 0)

    return kernel


def conv3x3_relu(x, w, b, out_dtype=jnp.bfloat16):
    """3x3 conv, stride 1, padding 1, fused bias+ReLU.  x: (N, H, W, Ci) NHWC."""
    N, H, W, Ci = x.shape
    assert w.shape[:3] == (3, 3, Ci), (w.shape, Ci)
    Co = w.shape[-1]
    tco = Co if Co <= _TCO_MAX else _TCO_MAX
    assert Co % tco == 0, (Co, tco)
    n_co = Co // tco

    # Row-chunk: largest divisor of H with TH*W <= _CHUNK_ROWS  (no ragged tiles).
    TH = _largest_divisor(H, max(1, _CHUNK_ROWS // W))
    n_chunks = H // TH

    cip, cop = _pad128(Ci), _pad128(tco)
    vmem_need = (
        2 * H * _pad8(W) * cip * 2            # input block (double buffered, bf16)
        + 2 * 9 * _pad8(Ci) * cop * 2         # weight block (double buffered)
        + 2 * H * _pad8(W) * cop * 2          # output block (double buffered)
        + (H + 2) * _pad8(W + 2) * cip * 2    # padded-image scratch
        + 3 * TH * _pad8(W) * cop * 4         # f32 accumulator + epilogue temporaries
        + 4 * TH * _pad8(W) * cip * 2)        # per-tap slice temporaries

    out = pl.pallas_call(
        _make_conv_kernel(H, W, Ci, tco, TH, n_chunks),
        out_shape=jax.ShapeDtypeStruct((N, H, W, Co), out_dtype),
        grid_spec=pltpu.PrefetchScalarGridSpec(
            num_scalar_prefetch=0,
            grid=(N, n_co),                                   # co inner: x block revisited
            in_specs=[
                pl.BlockSpec((1, H, W, Ci), lambda n, c: (n, 0, 0, 0)),
                pl.BlockSpec((3, 3, Ci, tco), lambda n, c: (0, 0, 0, c)),
                pl.BlockSpec((1, tco), lambda n, c: (0, c)),
            ],
            out_specs=pl.BlockSpec((1, H, W, tco), lambda n, c: (n, 0, 0, c)),
            scratch_shapes=[pltpu.VMEM((H + 2, W + 2, Ci), jnp.bfloat16)],
        ),
        compiler_params=pltpu.CompilerParams(
            dimension_semantics=("parallel", "parallel"),
            vmem_limit_bytes=_vmem_limit_bytes(vmem_need)),
    )(x.astype(jnp.bfloat16),
      w.astype(jnp.bfloat16),
      b.reshape(1, Co).astype(jnp.float32))
    return out


# -------------------------------------- maxpool ---------------------------------------
def _make_pool_kernel(C):
    def kernel(x_ref, o_ref):
        # x_ref: (1, tho, 2, Wo, 2C)   o_ref: (1, tho, Wo, C)
        v = x_ref[0]
        hm = jnp.maximum(v[:, 0], v[:, 1])                  # H-pair max -> (tho, Wo, 2C)
        o_ref[0] = jnp.maximum(hm[..., :C], hm[..., C:])    # W-pair max (lane halves)
    return kernel


def maxpool2x2(x):
    """MaxPool2d(kernel=2, stride=2) with PyTorch floor semantics; one HBM read."""
    N, H, W, C = x.shape
    Ho, Wo = H // 2, W // 2
    x = x[:, :2 * Ho, :2 * Wo, :]                 # no-op for even H/W
    xr = x.reshape(N, Ho, 2, Wo, 2 * C)           # pure-metadata reshape; lanes = 2C >= 128
    itm = x.dtype.itemsize
    tho = _largest_divisor(Ho, max(1, _POOL_TILE_BYTES // max(1, 4 * Wo * C * itm)))

    vmem_need = (2 * tho * 2 * _pad8(Wo) * _pad128(2 * C) * itm
                 + 2 * tho * _pad8(Wo) * _pad128(C) * itm
                 + 4 * tho * _pad8(Wo) * _pad128(2 * C) * itm)

    return pl.pallas_call(
        _make_pool_kernel(C),
        out_shape=jax.ShapeDtypeStruct((N, Ho, Wo, C), x.dtype),
        grid_spec=pltpu.PrefetchScalarGridSpec(
            num_scalar_prefetch=0,
            grid=(N, Ho // tho),
            in_specs=[pl.BlockSpec((1, tho, 2, Wo, 2 * C),
                                   lambda n, h: (n, h, 0, 0, 0))],
            out_specs=pl.BlockSpec((1, tho, Wo, C), lambda n, h: (n, h, 0, 0)),
        ),
        compiler_params=pltpu.CompilerParams(
            dimension_semantics=("parallel", "parallel"),
            vmem_limit_bytes=_vmem_limit_bytes(vmem_need)),
    )(xr)


# -------------------------------------- forward ---------------------------------------
@partial(jax.jit, static_argnames=("nchw_f32_outputs",))
def vgg16_forward(params, x_nchw, nchw_f32_outputs=True):
    """Semantics of losses/lpips.py::vgg16.forward (torchvision vgg16.features[0:30])."""
    h = jnp.transpose(x_nchw, (0, 2, 3, 1)).astype(jnp.bfloat16)   # NCHW -> NHWC, bf16
    conv = lambda t, i: conv3x3_relu(t, params[i][0], params[i][1])

    h = conv(conv(h, 0), 1);                          relu1_2 = h   # features[0:4]
    h = conv(conv(maxpool2x2(h), 2), 3);              relu2_2 = h   # features[4:9]
    h = conv(conv(conv(maxpool2x2(h), 4), 5), 6);     relu3_3 = h   # features[9:16]
    h = conv(conv(conv(maxpool2x2(h), 7), 8), 9);     relu4_3 = h   # features[16:23]
    h = conv(conv(conv(maxpool2x2(h), 10), 11), 12);  relu5_3 = h   # features[23:30]

    if nchw_f32_outputs:   # PyTorch-compatible layout/dtype (extra HBM round trip)
        cvt = lambda t: jnp.transpose(t.astype(jnp.float32), (0, 3, 1, 2))
    else:                  # cheaper: NHWC bf16, for consumers that can fuse the cast
        cvt = lambda t: t
    return VggOutputs(cvt(relu1_2), cvt(relu2_2), cvt(relu3_3),
                      cvt(relu4_3), cvt(relu5_3))


# ------------------------------------ self-tests --------------------------------------
def _self_test_conv(key):
    """Integer-exact check of the conv kernel vs lax.conv (no rounding anywhere)."""
    kx, kw, kb = jax.random.split(key, 3)
    x = jax.random.randint(kx, (2, 8, 8, 8), -1, 2).astype(jnp.float32)
    w = jax.random.randint(kw, (3, 3, 8, 16), -1, 2).astype(jnp.float32)
    b = jax.random.randint(kb, (16,), -3, 4).astype(jnp.float32)
    got = conv3x3_relu(x, w, b).astype(jnp.float32)
    ref = lax.conv_general_dilated(x, w, (1, 1), ((1, 1), (1, 1)),
                                   dimension_numbers=("NHWC", "HWIO", "NHWC"),
                                   precision=lax.Precision.HIGHEST)
    ref = jnp.maximum(ref + b, 0.0)
    assert jnp.array_equal(got, ref), "conv3x3_relu mismatch"


def _self_test_pool(key):
    """Exact check of the maxpool kernel (max is rounding-free); odd sizes floor."""
    y = jax.random.normal(key, (2, 7, 7, 128), jnp.float32).astype(jnp.bfloat16)
    got = maxpool2x2(y)
    ref = y[:, :6, :6, :].reshape(2, 3, 2, 3, 2, 128).max(axis=(2, 4))
    assert jnp.array_equal(got, ref), "maxpool2x2 mismatch"


if __name__ == "__main__":
    key = jax.random.PRNGKey(0)
    pkey, xkey, t1, t2 = jax.random.split(key, 4)

    _self_test_conv(t1)
    _self_test_pool(t2)

    params = init_vgg16_params(pkey)
    x = jax.random.normal(xkey, (2, 3, 16, 16), jnp.float32)   # NCHW, like the torch module
    out = jax.block_until_ready(vgg16_forward(params, x))

    expected = {
        "relu1_2": (2, 64, 16, 16),
        "relu2_2": (2, 128, 8, 8),
        "relu3_3": (2, 256, 4, 4),
        "relu4_3": (2, 512, 2, 2),
        "relu5_3": (2, 512, 1, 1),
    }
    for name, exp in expected.items():
        got = getattr(out, name)
        assert tuple(got.shape) == exp, (name, tuple(got.shape), exp)
        assert got.dtype == jnp.float32, (name, got.dtype)
        assert bool(jnp.all(jnp.isfinite(got))), name
    print("KERNEL_OK")
</pallas_src>

<mosaic_0001>
module attributes {stable_mosaic.version = 11 : i64} {
  func.func @kernel(%arg0: i32, %arg1: i32, %arg2: memref<1x8x8x8xbf16, #tpu.memory_space<vmem>>, %arg3: memref<3x3x8x16xbf16, #tpu.memory_space<vmem>>, %arg4: memref<1x16xf32, #tpu.memory_space<vmem>>, %arg5: memref<1x8x8x16xbf16, #tpu.memory_space<vmem>>, %arg6: memref<10x10x8xbf16, #tpu.memory_space<vmem>>) attributes {dimension_semantics = [#tpu.dimension_semantics<parallel>, #tpu.dimension_semantics<parallel>], iteration_bounds = array<i64: 2, 1>, scalar_prefetch = 0 : i64, scratch_operands = 1 : i64, tpu.core_type = #tpu.core_type<tc>, window_params = [{transform_indices = @transform_0, window_bounds = array<i64: 1, 8, 8, 8>}, {transform_indices = @transform_1, window_bounds = array<i64: 3, 3, 8, 16>}, {transform_indices = @transform_2, window_bounds = array<i64: 1, 16>}, {transform_indices = @transform_3, window_bounds = array<i64: 1, 8, 8, 16>}]} {
    %cst = arith.constant 0.000000e+00 : bf16
    %0 = vector.broadcast %cst : bf16 to vector<1x10x8xbf16>
    %c0 = arith.constant 0 : index
    %c0_0 = arith.constant 0 : index
    %c0_1 = arith.constant 0 : index
    %1 = vector.load %arg6[%c0, %c0_0, %c0_1] : memref<10x10x8xbf16, #tpu.memory_space<vmem>>, vector<1x10x8xbf16>
    tpu.vector_store %arg6[%c0, %c0_0, %c0_1], %0 {strides = array<i32>} : memref<10x10x8xbf16, #tpu.memory_space<vmem>>, vector<1x10x8xbf16>,
    %cst_2 = arith.constant 0.000000e+00 : bf16
    %2 = vector.broadcast %cst_2 : bf16 to vector<1x10x8xbf16>
    %c9 = arith.constant 9 : index
    %c0_3 = arith.constant 0 : index
    %c0_4 = arith.constant 0 : index
    %3 = vector.load %arg6[%c9, %c0_3, %c0_4] : memref<10x10x8xbf16, #tpu.memory_space<vmem>>, vector<1x10x8xbf16>
    tpu.vector_store %arg6[%c9, %c0_3, %c0_4], %2 {strides = array<i32>} : memref<10x10x8xbf16, #tpu.memory_space<vmem>>, vector<1x10x8xbf16>,
    %cst_5 = arith.constant 0.000000e+00 : bf16
    %4 = vector.broadcast %cst_5 : bf16 to vector<10x1x8xbf16>
    %c0_6 = arith.constant 0 : index
    %c0_7 = arith.constant 0 : index
    %c0_8 = arith.constant 0 : index
    %5 = vector.load %arg6[%c0_6, %c0_7, %c0_8] : memref<10x10x8xbf16, #tpu.memory_space<vmem>>, vector<10x1x8xbf16>
    tpu.vector_store %arg6[%c0_6, %c0_7, %c0_8], %4 {strides = array<i32>} : memref<10x10x8xbf16, #tpu.memory_space<vmem>>, vector<10x1x8xbf16>,
    %cst_9 = arith.constant 0.000000e+00 : bf16
    %6 = vector.broadcast %cst_9 : bf16 to vector<10x1x8xbf16>
    %c0_10 = arith.constant 0 : index
    %c9_11 = arith.constant 9 : index
    %c0_12 = arith.constant 0 : index
    %7 = vector.load %arg6[%c0_10, %c9_11, %c0_12] : memref<10x10x8xbf16, #tpu.memory_space<vmem>>, vector<10x1x8xbf16>
    tpu.vector_store %arg6[%c0_10, %c9_11, %c0_12], %6 {strides = array<i32>} : memref<10x10x8xbf16, #tpu.memory_space<vmem>>, vector<10x1x8xbf16>,
    %c0_13 = arith.constant 0 : index
    %c0_14 = arith.constant 0 : index
    %c0_15 = arith.constant 0 : index
    %c0_16 = arith.constant 0 : index
    %8 = vector.load %arg2[%c0_13, %c0_14, %c0_15, %c0_16] : memref<1x8x8x8xbf16, #tpu.memory_space<vmem>>, vector<1x8x8x8xbf16>
    %9 = vector.shape_cast %8 : vector<1x8x8x8xbf16> to vector<8x8x8xbf16>
    %c1 = arith.constant 1 : index
    %c1_17 = arith.constant 1 : index
    %c0_18 = arith.constant 0 : index
    %10 = vector.load %arg6[%c1, %c1_17, %c0_18] : memref<10x10x8xbf16, #tpu.memory_space<vmem>>, vector<8x8x8xbf16>
    tpu.vector_store %arg6[%c1, %c1_17, %c0_18], %9 {strides = array<i32>} : memref<10x10x8xbf16, #tpu.memory_space<vmem>>, vector<8x8x8xbf16>,
    %c0_19 = arith.constant 0 : index
    %c0_20 = arith.constant 0 : index
    %11 = vector.load %arg4[%c0_19, %c0_20] : memref<1x16xf32, #tpu.memory_space<vmem>>, vector<1x16xf32>
    %cst_21 = arith.constant 0.000000e+00 : f32
    %12 = vector.broadcast %cst_21 : f32 to vector<64x16xf32>
    %c0_22 = arith.constant 0 : index
    %c0_23 = arith.constant 0 : index
    %c0_24 = arith.constant 0 : index
    %13 = vector.load %arg6[%c0_22, %c0_23, %c0_24] : memref<10x10x8xbf16, #tpu.memory_space<vmem>>, vector<8x8x8xbf16>
    %14 = vector.shape_cast %13 : vector<8x8x8xbf16> to vector<64x8xbf16>
    %c0_25 = arith.constant 0 : index
    %c0_26 = arith.constant 0 : index
    %c0_27 = arith.constant 0 : index
    %c0_28 = arith.constant 0 : index
    %15 = vector.load %arg3[%c0_25, %c0_26, %c0_27, %c0_28] : memref<3x3x8x16xbf16, #tpu.memory_space<vmem>>, vector<1x1x8x16xbf16>
    %16 = vector.shape_cast %15 : vector<1x1x8x16xbf16> to vector<8x16xbf16>
    %cst_29 = arith.constant dense<0.000000e+00> : vector<64x16xf32>
    %17 = tpu.matmul %14, %16, %cst_29 {dimension_numbers = #tpu.dot_dimension_numbers<[1], [0], [0], [1], [0, 0, 1, 1], [], []>} : vector<64x8xbf16>, vector<8x16xbf16>, vector<64x16xf32> -> vector<64x16xf32>
    %18 = arith.addf %12, %17 : vector<64x16xf32>
    %c0_30 = arith.constant 0 : index
    %c1_31 = arith.constant 1 : index
    %c0_32 = arith.constant 0 : index
    %19 = vector.load %arg6[%c0_30, %c1_31, %c0_32] : memref<10x10x8xbf16, #tpu.memory_space<vmem>>, vector<8x8x8xbf16>
    %20 = vector.shape_cast %19 : vector<8x8x8xbf16> to vector<64x8xbf16>
    %c0_33 = arith.constant 0 : index
    %c1_34 = arith.constant 1 : index
    %c0_35 = arith.constant 0 : index
    %c0_36 = arith.constant 0 : index
    %21 = vector.load %arg3[%c0_33, %c1_34, %c0_35, %c0_36] : memref<3x3x8x16xbf16, #tpu.memory_space<vmem>>, vector<1x1x8x16xbf16>
    %22 = vector.shape_cast %21 : vector<1x1x8x16xbf16> to vector<8x16xbf16>
    %cst_37 = arith.constant dense<0.000000e+00> : vector<64x16xf32>
    %23 = tpu.matmul %20, %22, %cst_37 {dimension_numbers = #tpu.dot_dimension_numbers<[1], [0], [0], [1], [0, 0, 1, 1], [], []>} : vector<64x8xbf16>, vector<8x16xbf16>, vector<64x16xf32> -> vector<64x16xf32>
    %24 = arith.addf %18, %23 : vector<64x16xf32>
    %c0_38 = arith.constant 0 : index
    %c2 = arith.constant 2 : index
    %c0_39 = arith.constant 0 : index
    %25 = vector.load %arg6[%c0_38, %c2, %c0_39] : memref<10x10x8xbf16, #tpu.memory_space<vmem>>, vector<8x8x8xbf16>
    %26 = vector.shape_cast %25 : vector<8x8x8xbf16> to vector<64x8xbf16>
    %c0_40 = arith.constant 0 : index
    %c2_41 = arith.constant 2 : index
    %c0_42 = arith.constant 0 : index
    %c0_43 = arith.constant 0 : index
    %27 = vector.load %arg3[%c0_40, %c2_41, %c0_42, %c0_43] : memref<3x3x8x16xbf16, #tpu.memory_space<vmem>>, vector<1x1x8x16xbf16>
    %28 = vector.shape_cast %27 : vector<1x1x8x16xbf16> to vector<8x16xbf16>
    %cst_44 = arith.constant dense<0.000000e+00> : vector<64x16xf32>
    %29 = tpu.matmul %26, %28, %cst_44 {dimension_numbers = #tpu.dot_dimension_numbers<[1], [0], [0], [1], [0, 0, 1, 1], [], []>} : vector<64x8xbf16>, vector<8x16xbf16>, vector<64x16xf32> -> vector<64x16xf32>
    %30 = arith.addf %24, %29 : vector<64x16xf32>
    %c1_45 = arith.constant 1 : index
    %c0_46 = arith.constant 0 : index
    %c0_47 = arith.constant 0 : index
    %31 = vector.load %arg6[%c1_45, %c0_46, %c0_47] : memref<10x10x8xbf16, #tpu.memory_space<vmem>>, vector<8x8x8xbf16>
    %32 = vector.shape_cast %31 : vector<8x8x8xbf16> to vector<64x8xbf16>
    %c1_48 = arith.constant 1 : index
    %c0_49 = arith.constant 0 : index
    %c0_50 = arith.constant 0 : index
    %c0_51 = arith.constant 0 : index
    %33 = vector.load %arg3[%c1_48, %c0_49, %c0_50, %c0_51] : memref<3x3x8x16xbf16, #tpu.memory_space<vmem>>, vector<1x1x8x16xbf16>
    %34 = vector.shape_cast %33 : vector<1x1x8x16xbf16> to vector<8x16xbf16>
    %cst_52 = arith.constant dense<0.000000e+00> : vector<64x16xf32>
    %35 = tpu.matmul %32, %34, %cst_52 {dimension_numbers = #tpu.dot_dimension_numbers<[1], [0], [0], [1], [0, 0, 1, 1], [], []>} : vector<64x8xbf16>, vector<8x16xbf16>, vector<64x16xf32> -> vector<64x16xf32>
    %36 = arith.addf %30, %35 : vector<64x16xf32>
    %c1_53 = arith.constant 1 : index
    %c1_54 = arith.constant 1 : index
    %c0_55 = arith.constant 0 : index
    %37 = vector.load %arg6[%c1_53, %c1_54, %c0_55] : memref<10x10x8xbf16, #tpu.memory_space<vmem>>, vector<8x8x8xbf16>
    %38 = vector.shape_cast %37 : vector<8x8x8xbf16> to vector<64x8xbf16>
    %c1_56 = arith.constant 1 : index
    %c1_57 = arith.constant 1 : index
    %c0_58 = arith.constant 0 : index
    %c0_59 = arith.constant 0 : index
    %39 = vector.load %arg3[%c1_56, %c1_57, %c0_58, %c0_59] : memref<3x3x8x16xbf16, #tpu.memory_space<vmem>>, vector<1x1x8x16xbf16>
    %40 = vector.shape_cast %39 : vector<1x1x8x16xbf16> to vector<8x16xbf16>
    %cst_60 = arith.constant dense<0.000000e+00> : vector<64x16xf32>
    %41 = tpu.matmul %38, %40, %cst_60 {dimension_numbers = #tpu.dot_dimension_numbers<[1], [0], [0], [1], [0, 0, 1, 1], [], []>} : vector<64x8xbf16>, vector<8x16xbf16>, vector<64x16xf32> -> vector<64x16xf32>
    %42 = arith.addf %36, %41 : vector<64x16xf32>
    %c1_61 = arith.constant 1 : index
    %c2_62 = arith.constant 2 : index
    %c0_63 = arith.constant 0 : index
    %43 = vector.load %arg6[%c1_61, %c2_62, %c0_63] : memref<10x10x8xbf16, #tpu.memory_space<vmem>>, vector<8x8x8xbf16>
    %44 = vector.shape_cast %43 : vector<8x8x8xbf16> to vector<64x8xbf16>
    %c1_64 = arith.constant 1 : index
    %c2_65 = arith.constant 2 : index
    %c0_66 = arith.constant 0 : index
    %c0_67 = arith.constant 0 : index
    %45 = vector.load %arg3[%c1_64, %c2_65, %c0_66, %c0_67] : memref<3x3x8x16xbf16, #tpu.memory_space<vmem>>, vector<1x1x8x16xbf16>
    %46 = vector.shape_cast %45 : vector<1x1x8x16xbf16> to vector<8x16xbf16>
    %cst_68 = arith.constant dense<0.000000e+00> : vector<64x16xf32>
    %47 = tpu.matmul %44, %46, %cst_68 {dimension_numbers = #tpu.dot_dimension_numbers<[1], [0], [0], [1], [0, 0, 1, 1], [], []>} : vector<64x8xbf16>, vector<8x16xbf16>, vector<64x16xf32> -> vector<64x16xf32>
    %48 = arith.addf %42, %47 : vector<64x16xf32>
    %c2_69 = arith.constant 2 : index
    %c0_70 = arith.constant 0 : index
    %c0_71 = arith.constant 0 : index
    %49 = vector.load %arg6[%c2_69, %c0_70, %c0_71] : memref<10x10x8xbf16, #tpu.memory_space<vmem>>, vector<8x8x8xbf16>
    %50 = vector.shape_cast %49 : vector<8x8x8xbf16> to vector<64x8xbf16>
    %c2_72 = arith.constant 2 : index
    %c0_73 = arith.constant 0 : index
    %c0_74 = arith.constant 0 : index
    %c0_75 = arith.constant 0 : index
    %51 = vector.load %arg3[%c2_72, %c0_73, %c0_74, %c0_75] : memref<3x3x8x16xbf16, #tpu.memory_space<vmem>>, vector<1x1x8x16xbf16>
    %52 = vector.shape_cast %51 : vector<1x1x8x16xbf16> to vector<8x16xbf16>
    %cst_76 = arith.constant dense<0.000000e+00> : vector<64x16xf32>
    %53 = tpu.matmul %50, %52, %cst_76 {dimension_numbers = #tpu.dot_dimension_numbers<[1], [0], [0], [1], [0, 0, 1, 1], [], []>} : vector<64x8xbf16>, vector<8x16xbf16>, vector<64x16xf32> -> vector<64x16xf32>
    %54 = arith.addf %48, %53 : vector<64x16xf32>
    %c2_77 = arith.constant 2 : index
    %c1_78 = arith.constant 1 : index
    %c0_79 = arith.constant 0 : index
    %55 = vector.load %arg6[%c2_77, %c1_78, %c0_79] : memref<10x10x8xbf16, #tpu.memory_space<vmem>>, vector<8x8x8xbf16>
    %56 = vector.shape_cast %55 : vector<8x8x8xbf16> to vector<64x8xbf16>
    %c2_80 = arith.constant 2 : index
    %c1_81 = arith.constant 1 : index
    %c0_82 = arith.constant 0 : index
    %c0_83 = arith.constant 0 : index
    %57 = vector.load %arg3[%c2_80, %c1_81, %c0_82, %c0_83] : memref<3x3x8x16xbf16, #tpu.memory_space<vmem>>, vector<1x1x8x16xbf16>
    %58 = vector.shape_cast %57 : vector<1x1x8x16xbf16> to vector<8x16xbf16>
    %cst_84 = arith.constant dense<0.000000e+00> : vector<64x16xf32>
    %59 = tpu.matmul %56, %58, %cst_84 {dimension_numbers = #tpu.dot_dimension_numbers<[1], [0], [0], [1], [0, 0, 1, 1], [], []>} : vector<64x8xbf16>, vector<8x16xbf16>, vector<64x16xf32> -> vector<64x16xf32>
    %60 = arith.addf %54, %59 : vector<64x16xf32>
    %c2_85 = arith.constant 2 : index
    %c2_86 = arith.constant 2 : index
    %c0_87 = arith.constant 0 : index
    %61 = vector.load %arg6[%c2_85, %c2_86, %c0_87] : memref<10x10x8xbf16, #tpu.memory_space<vmem>>, vector<8x8x8xbf16>
    %62 = vector.shape_cast %61 : vector<8x8x8xbf16> to vector<64x8xbf16>
    %c2_88 = arith.constant 2 : index
    %c2_89 = arith.constant 2 : index
    %c0_90 = arith.constant 0 : index
    %c0_91 = arith.constant 0 : index
    %63 = vector.load %arg3[%c2_88, %c2_89, %c0_90, %c0_91] : memref<3x3x8x16xbf16, #tpu.memory_space<vmem>>, vector<1x1x8x16xbf16>
    %64 = vector.shape_cast %63 : vector<1x1x8x16xbf16> to vector<8x16xbf16>
    %cst_92 = arith.constant dense<0.000000e+00> : vector<64x16xf32>
    %65 = tpu.matmul %62, %64, %cst_92 {dimension_numbers = #tpu.dot_dimension_numbers<[1], [0], [0], [1], [0, 0, 1, 1], [], []>} : vector<64x8xbf16>, vector<8x16xbf16>, vector<64x16xf32> -> vector<64x16xf32>
    %66 = arith.addf %60, %65 : vector<64x16xf32>
    %67 = vector.broadcast %11 : vector<1x16xf32> to vector<64x16xf32>
    %68 = arith.addf %66, %67 : vector<64x16xf32>
    %cst_93 = arith.constant 0.000000e+00 : f32
    %69 = vector.broadcast %cst_93 : f32 to vector<64x16xf32>
    %70 = arith.maximumf %68, %69 : vector<64x16xf32>
    %71 = arith.truncf %70 : vector<64x16xf32> to vector<64x16xbf16>
    %72 = vector.shape_cast %71 : vector<64x16xbf16> to vector<8x8x16xbf16>
    %c0_94 = arith.constant 0 : index
    %c0_95 = arith.constant 0 : index
    %c0_96 = arith.constant 0 : index
    %c0_97 = arith.constant 0 : index
    %73 = vector.load %arg5[%c0_94, %c0_95, %c0_96, %c0_97] : memref<1x8x8x16xbf16, #tpu.memory_space<vmem>>, vector<1x8x8x16xbf16>
    %74 = vector.shape_cast %73 : vector<1x8x8x16xbf16> to vector<8x8x16xbf16>
    %75 = vector.shape_cast %72 : vector<8x8x16xbf16> to vector<1x8x8x16xbf16>
    tpu.vector_store %arg5[%c0_94, %c0_95, %c0_96, %c0_97], %75 {strides = array<i32>} : memref<1x8x8x16xbf16, #tpu.memory_space<vmem>>, vector<1x8x8x16xbf16>,
    return
  }
  func.func @transform_0(%arg0: i32, %arg1: i32) -> (i32, i32, i32, i32) {
    %c0_i32 = arith.constant 0 : i32
    %c0_i32_0 = arith.constant 0 : i32
    %c0_i32_1 = arith.constant 0 : i32
    %c0_i32_2 = arith.constant 0 : i32
    return %arg0, %c0_i32, %c0_i32_0, %c0_i32_1 : i32, i32, i32, i32
  }
  func.func @transform_1(%arg0: i32, %arg1: i32) -> (i32, i32, i32, i32) {
    %c0_i32 = arith.constant 0 : i32
    %c0_i32_0 = arith.constant 0 : i32
    %c0_i32_1 = arith.constant 0 : i32
    %c0_i32_2 = arith.constant 0 : i32
    return %c0_i32, %c0_i32_0, %c0_i32_1, %arg1 : i32, i32, i32, i32
  }
  func.func @transform_2(%arg0: i32, %arg1: i32) -> (i32, i32) {
    %c0_i32 = arith.constant 0 : i32
    %c0_i32_0 = arith.constant 0 : i32
    return %c0_i32, %arg1 : i32, i32
  }
  func.func @transform_3(%arg0: i32, %arg1: i32) -> (i32, i32, i32, i32) {
    %c0_i32 = arith.constant 0 : i32
    %c0_i32_0 = arith.constant 0 : i32
    %c0_i32_1 = arith.constant 0 : i32
    return %arg0, %c0_i32, %c0_i32_0, %arg1 : i32, i32, i32, i32
  }
}

</mosaic_0001>

<llo_original>
// kernel: tpu_custom_call.1
$region0: #{tpu_custom_call.1}
  #allocation0 [shape = 'u32[]', space=smem, size = 0x4, offset = 0x4, fixed_abs, tag = 'smem constant byte address 0x4 - core index']
  #allocation1 [shape = 'u32[144,128]{1,0:T(1,128)}', space=vmem, size = 0x12000, scoped, tag = 'internal scratch']
  #allocation2 [shape = 'bf16[10,10,8]{2,1,0:T(8,128)(2,1)}', space=vmem, size = 0xa000, scoped, tag = 'scratch operand']
  %s0 = inlined_call_operand.hbm [shape: bf16[2,8,8,8], index: 0, kind: input, shape index: {}]
  %s1 = inlined_call_operand.hbm [shape: bf16[3,3,8,16], index: 1, kind: input, shape index: {}]
  %s2 = inlined_call_operand.vmem [shape: f32[1,16], index: 2, kind: input, shape index: {}]
  %s3 = inlined_call_operand.hbm [shape: bf16[2,8,8,16], index: 3, kind: output, shape index: {}]
  %s4 = sld [smem:[#allocation0]]
  $region53: #{tpu_custom_call.1} parent=0
    _
  %s6 = ssub.s32 1, %s4
  %s7 = scalar_select 0, %s6, %s4
  $region1: #{tpu_custom_call.1} parent=0
    #allocation3 [shape = 'u8[32768]{0}', space=vmem, size = 0x8000, scoped, tag = 'input window, operand 0']
    #allocation4 [shape = 's32[2]{0}', space=sflag, size = 0x8, scoped, tag = 'scoped memory for tpu_custom_call.1']
    #allocation5 [shape = 's32[2]{0}', space=sflag, size = 0x8, scoped, tag = 'scoped memory for tpu_custom_call.1']
    #allocation6 [shape = 'u8[18432]{0}', space=vmem, size = 0x4800, scoped, tag = 'input window, operand 1, single buffered']
    #allocation7 [shape = 's32[1]{0}', space=sflag, size = 0x4, scoped, tag = 'scoped memory for tpu_custom_call.1']
    #allocation8 [shape = 'u8[32768]{0}', space=vmem, size = 0x8000, scoped, tag = 'output window, operand 0']
    %8 = vsyncpa [#allocation4], 0
    %s9 = scalar_lea.sflag [#allocation4], 1
    %10 = vsyncpa %s9, 0
    %11 = vsyncpa [#allocation7], 0
    %12 = vsyncpa [#allocation5], 0
    %s13 = scalar_lea.sflag [#allocation5], 1
    %14 = vsyncpa %s13, 0
    loop: start=0, step=1, limit=4
    $region2: #{tpu_custom_call.1} parent=1 // loop_pre_header
      _
    $region3: #{tpu_custom_call.1} parent=1 // loop_header
      %s16 = sphi 0, %s20
      %p17 = scmp.ge.s32.totalorder %s16, 4
      %s23 = sphi 0, %s35
      %s24 = sphi 0, %s31
      %s25 = sphi 0, %s23
      %s26 = sphi 0, %s24
      %s27 = sphi 0, %s25
      %s28 = sphi 0, %s26
      %s38 = sphi 0, %s40
      %s41 = sphi 0, %s38
      %s42 = sphi 0, %s41
      %s58 = sphi 0, %s42
      %s64 = sphi 0, %s66
      %s67 = sphi 0, %s64
      %s68 = sphi 0, %s67
      %s84 = sphi 0, %s68
      %s90 = sphi 0, %s92
      %s93 = sphi 0, %s90
      %s94 = sphi 0, %s93
      %s110 = sphi 0, %s94
      %s118 = sphi 0, %s120
      %s121 = sphi 0, %s118
      %s122 = sphi 0, %s121
      %s138 = sphi 0, %s122
    $region4: #{tpu_custom_call.1} parent=1 // loop_header_branch
      %19 = sbr.rel (%p17) target = $region8
    $region5: #{tpu_custom_call.1} parent=1 // loop_body
      %s21 = ssub.s32 %s16, 1
      %s22 = ssub.s32 %s16, 2
      %s29 = sadd.s32 1, %s24
      %p30 = scmp.ge.s32.totalorder %s29, 1
      %s31 = scalar_select %p30, 0, %s29
      %s32 = sadd.s32 1, %s23
      %s33 = scalar_select %p30, %s32, %s23
      %p34 = scmp.ge.s32.totalorder %s33, 2
      %s35 = scalar_select %p34, 0, %s33
      %s36 = ssub.s32 %s23, %s35
      %p37 = scmp.eq.s32.totalorder %s36, 0
      %s39 = sadd.s32 %s38, 1
      %s40 = scalar_select %p37, %s38, %s39
      %p43 = pneg %p37
      %p44 = scmp.eq.s32.totalorder %s16, 1
      %p45 = por %p43, %p44
      %p46 = scmp.ne.s32.totalorder %s38, %s41
      %p47 = scmp.eq.s32.totalorder %s16, 0
      %p48 = por %p46, %p47
      %p49 = scmp.ne.s32.totalorder %s38, %s41
      %p50 = scmp.eq.s32.totalorder %s21, 1
      %p51 = por %p49, %p50
      %p52 = scmp.ne.s32.totalorder %s41, %s42
      %p53 = scmp.eq.s32.totalorder %s21, 0
      %p54 = por %p52, %p53
      %p55 = scmp.ne.s32.totalorder %s41, %s42
      %p56 = scmp.eq.s32.totalorder %s22, 1
      %p57 = por %p55, %p56
      %p59 = scmp.ne.s32.totalorder %s42, %s58
      %p60 = scmp.eq.s32.totalorder %s22, 0
      %p61 = por %p59, %p60
      %s62 = ssub.s32 %s24, %s31
      %p63 = scmp.eq.s32.totalorder %s62, 0
      %s65 = sadd.s32 %s64, 1
      %s66 = scalar_select %p63, %s64, %s65
      %p69 = pneg %p63
      %p70 = scmp.eq.s32.totalorder %s16, 1
      %p71 = por %p69, %p70
      %p72 = scmp.ne.s32.totalorder %s64, %s67
      %p73 = scmp.eq.s32.totalorder %s16, 0
      %p74 = por %p72, %p73
      %p75 = scmp.ne.s32.totalorder %s64, %s67
      %p76 = scmp.eq.s32.totalorder %s21, 1
      %p77 = por %p75, %p76
      %p78 = scmp.ne.s32.totalorder %s67, %s68
      %p79 = scmp.eq.s32.totalorder %s21, 0
      %p80 = por %p78, %p79
      %p81 = scmp.ne.s32.totalorder %s67, %s68
      %p82 = scmp.eq.s32.totalorder %s22, 1
      %p83 = por %p81, %p82
      %p85 = scmp.ne.s32.totalorder %s68, %s84
      %p86 = scmp.eq.s32.totalorder %s22, 0
      %p87 = por %p85, %p86
      %s88 = ssub.s32 %s24, %s31
      %p89 = scmp.eq.s32.totalorder %s88, 0
      %s91 = sadd.s32 %s90, 1
      %s92 = scalar_select %p89, %s90, %s91
      %p95 = pneg %p89
      %p96 = scmp.eq.s32.totalorder %s16, 1
      %p97 = por %p95, %p96
      %p98 = scmp.ne.s32.totalorder %s90, %s93
      %p99 = scmp.eq.s32.totalorder %s16, 0
      %p100 = por %p98, %p99
      %p101 = scmp.ne.s32.totalorder %s90, %s93
      %p102 = scmp.eq.s32.totalorder %s21, 1
      %p103 = por %p101, %p102
      %p104 = scmp.ne.s32.totalorder %s93, %s94
      %p105 = scmp.eq.s32.totalorder %s21, 0
      %p106 = por %p104, %p105
      %p107 = scmp.ne.s32.totalorder %s93, %s94
      %p108 = scmp.eq.s32.totalorder %s22, 1
      %p109 = por %p107, %p108
      %p111 = scmp.ne.s32.totalorder %s94, %s110
      %p112 = scmp.eq.s32.totalorder %s22, 0
      %p113 = por %p111, %p112
      %s114 = ssub.s32 %s23, %s35
      %s115 = ssub.s32 %s24, %s31
      %s116 = sor.u32 %s114, %s115
      %p117 = scmp.eq.s32.totalorder %s116, 0
      %s119 = sadd.s32 %s118, 1
      %s120 = scalar_select %p117, %s118, %s119
      %p123 = pneg %p117
      %p124 = scmp.eq.s32.totalorder %s16, 1
      %p125 = por %p123, %p124
      %p126 = scmp.ne.s32.totalorder %s118, %s121
      %p127 = scmp.eq.s32.totalorder %s16, 0
      %p128 = por %p126, %p127
      %p129 = scmp.ne.s32.totalorder %s118, %s121
      %p130 = scmp.eq.s32.totalorder %s21, 1
      %p131 = por %p129, %p130
      %p132 = scmp.ne.s32.totalorder %s121, %s122
      %p133 = scmp.eq.s32.totalorder %s21, 0
      %p134 = por %p132, %p133
      %p135 = scmp.ne.s32.totalorder %s121, %s122
      %p136 = scmp.eq.s32.totalorder %s22, 1
      %p137 = por %p135, %p136
      %p139 = scmp.ne.s32.totalorder %s122, %s138
      %p140 = scmp.eq.s32.totalorder %s22, 0
      %p141 = por %p139, %p140
      %p142 = scmp.le.s32.totalorder 1, %s16
      %p143 = scmp.lt.s32.totalorder %s16, 3
      %p144 = pnand %p142, %p143
      %p145 = pneg %p144
      // Predicated region
      $region9: #{tpu_custom_call.1} parent=5 // pred_check
        _
      $region10: #{tpu_custom_call.1} parent=5 // pred_check_branch
        %147 = sbr.rel (%p144) target = $region12
      $region11: #{tpu_custom_call.1} parent=5 // pred_region
        %s148 = ssub.s32 %s16, 1
        // Predicated region
        $region13: #{tpu_custom_call.1} parent=11 // pred_check
          %p149 = pneg %p80
        $region14: #{tpu_custom_call.1} parent=11 // pred_check_branch
          %151 = sbr.rel (%p149) target = $region16
        $region15: #{tpu_custom_call.1} parent=11 // pred_region
          %s153 = ssub.s32 576, 576
          %154 = vsyncadd [#allocation7], %s153
          %s155 = smul.addr %s26, 64
          %s156 = scalar_lea.hbm %s1, %s155
          %s157 = sshll.u32 [#allocation6], 4
          %s158 = int_to_ptr.vmem [resolvable:$true] %s157
          %163 = dma.hbm_to_vmem [thread:$0]  %s156, 576, %s158, [#allocation7], 64, 64, 4
        $region16: #{tpu_custom_call.1} parent=11 // pred_fallthru
          _
        // Predicated region
        $region17: #{tpu_custom_call.1} parent=11 // pred_check
          %p164 = pneg %p106
        $region18: #{tpu_custom_call.1} parent=11 // pred_check_branch
          %166 = sbr.rel (%p164) target = $region20
        $region19: #{tpu_custom_call.1} parent=11 // pred_region
          %p167 = scmp.lt.s32.totalorder %s26, 0
          %s168 = scalar_select %p167, %s26, 0
          %s169 = scalar_lea.vmem %s2, %s168
        $region20: #{tpu_custom_call.1} parent=11 // pred_fallthru
          _
      $region12: #{tpu_custom_call.1} parent=5 // pred_fallthru
        _
      %p170 = scmp.lt.s32.totalorder %s16, 2
      // Predicated region
      $region21: #{tpu_custom_call.1} parent=5 // pred_check
        %p171 = pneg %p170
      $region22: #{tpu_custom_call.1} parent=5 // pred_check_branch
        %173 = sbr.rel (%p171) target = $region24
      $region23: #{tpu_custom_call.1} parent=5 // pred_region
        // Predicated region
        $region25: #{tpu_custom_call.1} parent=23 // pred_check
          %p174 = pneg %p48
        $region26: #{tpu_custom_call.1} parent=23 // pred_check_branch
          %176 = sbr.rel (%p174) target = $region28
        $region27: #{tpu_custom_call.1} parent=23 // pred_region
          %s177 = sand.u32 %s38, 1
          %s178 = scalar_lea.sflag [#allocation4], %s177
          %s179 = sand.u32 %s38, 1
          %s180 = smul.addr %s179, 32
          %s181 = scalar_lea.vmem [#allocation3], %s180
          %s183 = ssub.s32 512, 512
          %184 = vsyncadd %s178, %s183
          %s185 = smul.addr %s23, 8
          %s186 = smul.addr %s185, 64
          %s187 = scalar_lea.hbm %s0, %s186
          %s188 = sshll.u32 %s181, 4
          %s189 = int_to_ptr.vmem [resolvable:$true] %s188
          %194 = dma.hbm_to_vmem [thread:$0]  %s187, 512, %s189, %s178, 64, 64, 4
        $region28: #{tpu_custom_call.1} parent=23 // pred_fallthru
          _
      $region24: #{tpu_custom_call.1} parent=5 // pred_fallthru
        _
      %p195 = scmp.le.s32.totalorder 1, %s16
      %p196 = scmp.lt.s32.totalorder %s16, 3
      %p197 = pnand %p195, %p196
      %p198 = pneg %p197
      // Predicated region
      $region29: #{tpu_custom_call.1} parent=5 // pred_check
        _
      $region30: #{tpu_custom_call.1} parent=5 // pred_check_branch
        %200 = sbr.rel (%p197) target = $region32
      $region31: #{tpu_custom_call.1} parent=5 // pred_region
        %s201 = ssub.s32 %s16, 1
        %s202 = sand.u32 %s41, 1
        %s203 = scalar_lea.sflag [#allocation4], %s202
        %s204 = sand.u32 %s41, 1
        %s205 = smul.addr %s204, 32
        %s206 = scalar_lea.vmem [#allocation3], %s205
        // Predicated region
        $region33: #{tpu_custom_call.1} parent=31 // pred_check
          %p207 = pneg %p54
        $region34: #{tpu_custom_call.1} parent=31 // pred_check_branch
          %209 = sbr.rel (%p207) target = $region36
        $region35: #{tpu_custom_call.1} parent=31 // pred_region
          %210 = dma.done %s203, 512
        $region36: #{tpu_custom_call.1} parent=31 // pred_fallthru
          _
        // Predicated region
        $region37: #{tpu_custom_call.1} parent=31 // pred_check
          %p211 = pneg %p80
        $region38: #{tpu_custom_call.1} parent=31 // pred_check_branch
          %213 = sbr.rel (%p211) target = $region40
        $region39: #{tpu_custom_call.1} parent=31 // pred_region
          %214 = dma.done [#allocation7], 576
        $region40: #{tpu_custom_call.1} parent=31 // pred_fallthru
          _
        %s215 = sand.u32 %s41, 1
        %s216 = scalar_lea.sflag [#allocation4], %s215
        %s217 = sand.u32 %s41, 1
        %s218 = smul.addr %s217, 32
        %s219 = scalar_lea.vmem [#allocation3], %s218
        %p220 = pneg %p54
        %p221 = pneg %p51
        %p222 = pneg %p80
        %p223 = pneg %p77
        %p224 = scmp.lt.s32.totalorder %s26, 0
        %s225 = scalar_select %p224, %s26, 0
        %s226 = scalar_lea.vmem %s2, %s225
        %p227 = pneg %p106
        %p228 = pneg %p103
        %p229 = pneg %p134
        %p230 = pneg %p131
        %s231 = sand.u32 %s121, 1
        %s232 = scalar_lea.sflag [#allocation5], %s231
        %s233 = sand.u32 %s121, 1
        %s234 = smul.addr %s233, 32
        %s235 = scalar_lea.vmem [#allocation8], %s234
        %p236 = scmp.lt.s32.totalorder %s26, 0
        %s237 = scalar_select %p236, %s26, 0
        %s238 = scalar_lea.vmem %s2, %s237
        %vm240 = vcmask 60416
        %241 = vst.msk [vmem:[#allocation2] sm:$0xf] %vm240, 0
        %vm242 = vcmask 57344
        %243 = vst.msk [vmem:[#allocation2 + $0x4] sm:$0x1] %vm242, 0
        %s244 = scalar_lea.vmem [#allocation2], 72
        %245 = vst.msk [vmem:[%s244] sm:$0xf] %vm240, 0
        %246 = vst.msk [vmem:[%s244 + $0x4] sm:$0x1] %vm242, 0
        %vm247 = vcmask 57344
        %vm248 = vsmask.f32 256
        %vm249 = vmand %vm247, %vm248
        %v250 = vld [vmem:[#allocation2] sm:$0x1]
        %v251 = vsel %vm249, 0, %v250
        %252 = vst [vmem:[#allocation2] sm:$0x1] %v251
        %v253 = vld [vmem:[#allocation2 + $0x8] sm:$0x1]
        %v254 = vsel %vm249, 0, %v253
        %255 = vst [vmem:[#allocation2 + $0x8] sm:$0x1] %v254
        %v256 = vld [vmem:[#allocation2 + $0x10] sm:$0x1]
        %v257 = vsel %vm249, 0, %v256
        %258 = vst [vmem:[#allocation2 + $0x10] sm:$0x1] %v257
        %v259 = vld [vmem:[#allocation2 + $0x18] sm:$0x1]
        %v260 = vsel %vm249, 0, %v259
        %261 = vst [vmem:[#allocation2 + $0x18] sm:$0x1] %v260
        %v262 = vld [vmem:[#allocation2 + $0x20] sm:$0x1]
        %v263 = vsel %vm249, 0, %v262
        %264 = vst [vmem:[#allocation2 + $0x20] sm:$0x1] %v263
        %v265 = vld [vmem:[#allocation2 + $0x28] sm:$0x1]
        %v266 = vsel %vm249, 0, %v265
        %267 = vst [vmem:[#allocation2 + $0x28] sm:$0x1] %v266
        %v268 = vld [vmem:[#allocation2 + $0x30] sm:$0x1]
        %v269 = vsel %vm249, 0, %v268
        %270 = vst [vmem:[#allocation2 + $0x30] sm:$0x1] %v269
        %v271 = vld [vmem:[#allocation2 + $0x38] sm:$0x1]
        %v272 = vsel %vm249, 0, %v271
        %273 = vst [vmem:[#allocation2 + $0x38] sm:$0x1] %v272
        %v274 = vld [vmem:[#allocation2 + $0x40] sm:$0x1]
        %v275 = vsel %vm249, 0, %v274
        %276 = vst [vmem:[#allocation2 + $0x40] sm:$0x1] %v275
        %v277 = vld [vmem:[#allocation2 + $0x48] sm:$0x1]
        %v278 = vsel %vm249, 0, %v277
        %279 = vst [vmem:[#allocation2 + $0x48] sm:$0x1] %v278
        %vm280 = vsmask.f32 7938
        %vm281 = vmand %vm247, %vm280
        %v282 = vld [vmem:[#allocation2 + $0x4] sm:$0x1]
        %v283 = vsel %vm281, 0, %v282
        %284 = vst [vmem:[#allocation2 + $0x4] sm:$0x1] %v283
        %v285 = vld [vmem:[#allocation2 + $0xc] sm:$0x1]
        %v286 = vsel %vm281, 0, %v285
        %287 = vst [vmem:[#allocation2 + $0xc] sm:$0x1] %v286
        %v288 = vld [vmem:[#allocation2 + $0x14] sm:$0x1]
        %v289 = vsel %vm281, 0, %v288
        %290 = vst [vmem:[#allocation2 + $0x14] sm:$0x1] %v289
        %v291 = vld [vmem:[#allocation2 + $0x1c] sm:$0x1]
        %v292 = vsel %vm281, 0, %v291
        %293 = vst [vmem:[#allocation2 + $0x1c] sm:$0x1] %v292
        %v294 = vld [vmem:[#allocation2 + $0x24] sm:$0x1]
        %v295 = vsel %vm281, 0, %v294
        %296 = vst [vmem:[#allocation2 + $0x24] sm:$0x1] %v295
        %v297 = vld [vmem:[#allocation2 + $0x2c] sm:$0x1]
        %v298 = vsel %vm281, 0, %v297
        %299 = vst [vmem:[#allocation2 + $0x2c] sm:$0x1] %v298
        %v300 = vld [vmem:[#allocation2 + $0x34] sm:$0x1]
        %v301 = vsel %vm281, 0, %v300
        %302 = vst [vmem:[#allocation2 + $0x34] sm:$0x1] %v301
        %v303 = vld [vmem:[#allocation2 + $0x3c] sm:$0x1]
        %v304 = vsel %vm281, 0, %v303
        %305 = vst [vmem:[#allocation2 + $0x3c] sm:$0x1] %v304
        %v306 = vld [vmem:[#allocation2 + $0x44] sm:$0x1]
        %v307 = vsel %vm281, 0, %v306
        %308 = vst [vmem:[#allocation2 + $0x44] sm:$0x1] %v307
        %v309 = vld [vmem:[#allocation2 + $0x4c] sm:$0x1]
        %v310 = vsel %vm281, 0, %v309
        %311 = vst [vmem:[#allocation2 + $0x4c] sm:$0x1] %v310
        %v312 = vld [vmem:[%s206] sm:$0xf]
        %v313 = vld [vmem:[%s206 + $0x4] sm:$0xf]
        %v314 = vld [vmem:[%s206 + $0x8] sm:$0xf]
        %v315 = vld [vmem:[%s206 + $0xc] sm:$0xf]
        %v316 = vld [vmem:[%s206 + $0x10] sm:$0xf]
        %v317 = vld [vmem:[%s206 + $0x14] sm:$0xf]
        %v318 = vld [vmem:[%s206 + $0x18] sm:$0xf]
        %v319 = vld [vmem:[%s206 + $0x1c] sm:$0xf]
        %v321 = vshrl.u32 %v312, 16
        %v323 = vrot.slane %v321, 7
        %v324 = vshll.u32 %v312, 16
        %v326 = vor.u32 %v323, %v324
        %v327 = vrot.slane %v323, 4
        %v329 = vshrl.u32 %v313, 16
        %v331 = vrot.slane %v329, 7
        %v332 = vshll.u32 %v313, 16
        %v334 = vor.u32 %v331, %v332
        %v335 = vrot.slane %v331, 4
        %v337 = vshrl.u32 %v314, 16
        %v339 = vrot.slane %v337, 7
        %v340 = vshll.u32 %v314, 16
        %v342 = vor.u32 %v339, %v340
        %v343 = vrot.slane %v339, 4
        %v345 = vshrl.u32 %v315, 16
        %v347 = vrot.slane %v345, 7
        %v348 = vshll.u32 %v315, 16
        %v350 = vor.u32 %v347, %v348
        %v351 = vrot.slane %v347, 4
        %v353 = vshrl.u32 %v316, 16
        %v355 = vrot.slane %v353, 7
        %v356 = vshll.u32 %v316, 16
        %v358 = vor.u32 %v355, %v356
        %v359 = vrot.slane %v355, 4
        %v361 = vshrl.u32 %v317, 16
        %v363 = vrot.slane %v361, 7
        %v364 = vshll.u32 %v317, 16
        %v366 = vor.u32 %v363, %v364
        %v367 = vrot.slane %v363, 4
        %v369 = vshrl.u32 %v318, 16
        %v371 = vrot.slane %v369, 7
        %v372 = vshll.u32 %v318, 16
        %v374 = vor.u32 %v371, %v372
        %v375 = vrot.slane %v371, 4
        %v377 = vshrl.u32 %v319, 16
        %v379 = vrot.slane %v377, 7
        %v380 = vshll.u32 %v319, 16
        %v382 = vor.u32 %v379, %v380
        %v383 = vrot.slane %v379, 4
        %s400 = scalar_lea.vmem [#allocation2], 8
        %vm401 = vcmask 60416
        %vm402 = vmand %vm401, %vm280
        %v403 = vld [vmem:[%s400] sm:$0xf]
        %v404 = vsel %vm402, %v326, %v403
        %405 = vst [vmem:[%s400] sm:$0xf] %v404
        %v406 = vld [vmem:[%s400 + $0x4] sm:$0x1]
        %v407 = vsel %vm249, %v327, %v406
        %408 = vst [vmem:[%s400 + $0x4] sm:$0x1] %v407
        %v409 = vld [vmem:[%s400 + $0x8] sm:$0xf]
        %v410 = vsel %vm402, %v334, %v409
        %411 = vst [vmem:[%s400 + $0x8] sm:$0xf] %v410
        %v412 = vld [vmem:[%s400 + $0xc] sm:$0x1]
        %v413 = vsel %vm249, %v335, %v412
        %414 = vst [vmem:[%s400 + $0xc] sm:$0x1] %v413
        %v415 = vld [vmem:[%s400 + $0x10] sm:$0xf]
        %v416 = vsel %vm402, %v342, %v415
        %417 = vst [vmem:[%s400 + $0x10] sm:$0xf] %v416
        %v418 = vld [vmem:[%s400 + $0x14] sm:$0x1]
        %v419 = vsel %vm249, %v343, %v418
        %420 = vst [vmem:[%s400 + $0x14] sm:$0x1] %v419
        %v421 = vld [vmem:[%s400 + $0x18] sm:$0xf]
        %v422 = vsel %vm402, %v350, %v421
        %423 = vst [vmem:[%s400 + $0x18] sm:$0xf] %v422
        %v424 = vld [vmem:[%s400 + $0x1c] sm:$0x1]
        %v425 = vsel %vm249, %v351, %v424
        %426 = vst [vmem:[%s400 + $0x1c] sm:$0x1] %v425
        %v427 = vld [vmem:[%s400 + $0x20] sm:$0xf]
        %v428 = vsel %vm402, %v358, %v427
        %429 = vst [vmem:[%s400 + $0x20] sm:$0xf] %v428
        %v430 = vld [vmem:[%s400 + $0x24] sm:$0x1]
        %v431 = vsel %vm249, %v359, %v430
        %432 = vst [vmem:[%s400 + $0x24] sm:$0x1] %v431
        %v433 = vld [vmem:[%s400 + $0x28] sm:$0xf]
        %v434 = vsel %vm402, %v366, %v433
        %435 = vst [vmem:[%s400 + $0x28] sm:$0xf] %v434
        %v436 = vld [vmem:[%s400 + $0x2c] sm:$0x1]
        %v437 = vsel %vm249, %v367, %v436
        %438 = vst [vmem:[%s400 + $0x2c] sm:$0x1] %v437
        %v439 = vld [vmem:[%s400 + $0x30] sm:$0xf]
        %v440 = vsel %vm402, %v374, %v439
        %441 = vst [vmem:[%s400 + $0x30] sm:$0xf] %v440
        %v442 = vld [vmem:[%s400 + $0x34] sm:$0x1]
        %v443 = vsel %vm249, %v375, %v442
        %444 = vst [vmem:[%s400 + $0x34] sm:$0x1] %v443
        %v445 = vld [vmem:[%s400 + $0x38] sm:$0xf]
        %v446 = vsel %vm402, %v382, %v445
        %447 = vst [vmem:[%s400 + $0x38] sm:$0xf] %v446
        %v448 = vld [vmem:[%s400 + $0x3c] sm:$0x1]
        %v449 = vsel %vm249, %v383, %v448
        %450 = vst [vmem:[%s400 + $0x3c] sm:$0x1] %v449
        %v451 = vld [vmem:[%s238] sm:$0x1]
        %v452 = vld [vmem:[#allocation2] sm:$0xf]
        %v453 = vld [vmem:[#allocation2 + $0x8] sm:$0xf]
        %v454 = vld [vmem:[#allocation2 + $0x10] sm:$0xf]
        %v455 = vld [vmem:[#allocation2 + $0x18] sm:$0xf]
        %v456 = vld [vmem:[#allocation2 + $0x20] sm:$0xf]
        %v457 = vld [vmem:[#allocation2 + $0x28] sm:$0xf]
        %v458 = vld [vmem:[#allocation2 + $0x30] sm:$0xf]
        %v459 = vld [vmem:[#allocation2 + $0x38] sm:$0xf]
        %v460 = vld [vmem:[#allocation6] sm:$0xf]
        %v461 = vld [vmem:[#allocation2 + $0x4] sm:$0x1]
        %v462 = vld [vmem:[#allocation2 + $0xc] sm:$0x1]
        %v463 = vld [vmem:[#allocation2 + $0x14] sm:$0x1]
        %v464 = vld [vmem:[#allocation2 + $0x1c] sm:$0x1]
        %v465 = vld [vmem:[#allocation2 + $0x24] sm:$0x1]
        %v466 = vld [vmem:[#allocation2 + $0x2c] sm:$0x1]
        %v467 = vld [vmem:[#allocation2 + $0x34] sm:$0x1]
        %v468 = vld [vmem:[#allocation2 + $0x3c] sm:$0x1]
        %vm469 = vsmask.f32 3328
        %vm470 = vsmask.f32 7440
        %vm471 = vmor %vm469, %vm470
        %v473 = vshrl.u32 %v452, 16
        %v475 = vrot.slane %v473, 4
        %v476 = vshll.u32 %v452, 16
        %v478 = vrot.slane %v476, 5
        %v479 = vor.u32 %v475, %v478
        %v480 = vrot.slane %v479, 4
        %v482 = vshll.u32 %v461, 16
        %v484 = vrot.slane %v482, 5
        %v485 = vsel %vm471, %v480, %v484
        %v487 = vshrl.u32 %v453, 16
        %v489 = vrot.slane %v487, 4
        %v490 = vshll.u32 %v453, 16
        %v492 = vrot.slane %v490, 5
        %v493 = vor.u32 %v489, %v492
        %v494 = vrot.slane %v493, 4
        %v496 = vshll.u32 %v462, 16
        %v498 = vrot.slane %v496, 5
        %v499 = vsel %vm471, %v494, %v498
        %v501 = vshrl.u32 %v454, 16
        %v503 = vrot.slane %v501, 4
        %v504 = vshll.u32 %v454, 16
        %v506 = vrot.slane %v504, 5
        %v507 = vor.u32 %v503, %v506
        %v508 = vrot.slane %v507, 4
        %v510 = vshll.u32 %v463, 16
        %v512 = vrot.slane %v510, 5
        %v513 = vsel %vm471, %v508, %v512
        %v515 = vshrl.u32 %v455, 16
        %v517 = vrot.slane %v515, 4
        %v518 = vshll.u32 %v455, 16
        %v520 = vrot.slane %v518, 5
        %v521 = vor.u32 %v517, %v520
        %v522 = vrot.slane %v521, 4
        %v524 = vshll.u32 %v464, 16
        %v526 = vrot.slane %v524, 5
        %v527 = vsel %vm471, %v522, %v526
        %v529 = vshrl.u32 %v456, 16
        %v531 = vrot.slane %v529, 4
        %v532 = vshll.u32 %v456, 16
        %v534 = vrot.slane %v532, 5
        %v535 = vor.u32 %v531, %v534
        %v536 = vrot.slane %v535, 4
        %v538 = vshll.u32 %v465, 16
        %v540 = vrot.slane %v538, 5
        %v541 = vsel %vm471, %v536, %v540
        %v543 = vshrl.u32 %v457, 16
        %v545 = vrot.slane %v543, 4
        %v546 = vshll.u32 %v457, 16
        %v548 = vrot.slane %v546, 5
        %v549 = vor.u32 %v545, %v548
        %v550 = vrot.slane %v549, 4
        %v552 = vshll.u32 %v466, 16
        %v554 = vrot.slane %v552, 5
        %v555 = vsel %vm471, %v550, %v554
        %v557 = vshrl.u32 %v458, 16
        %v559 = vrot.slane %v557, 4
        %v560 = vshll.u32 %v458, 16
        %v562 = vrot.slane %v560, 5
        %v563 = vor.u32 %v559, %v562
        %v564 = vrot.slane %v563, 4
        %v566 = vshll.u32 %v467, 16
        %v568 = vrot.slane %v566, 5
        %v569 = vsel %vm471, %v564, %v568
        %v571 = vshrl.u32 %v459, 16
        %v573 = vrot.slane %v571, 4
        %v574 = vshll.u32 %v459, 16
        %v576 = vrot.slane %v574, 5
        %v577 = vor.u32 %v573, %v576
        %v578 = vrot.slane %v577, 4
        %v580 = vshll.u32 %v468, 16
        %v582 = vrot.slane %v580, 5
        %v583 = vsel %vm471, %v578, %v582
        %s584 = scalar_lea.vmem [#allocation6], 4
        %v585 = vld [vmem:[%s584] sm:$0xf]
        %v586 = vunpack.c.l.b16 %v485
        %v587 = vunpack.c.l.b16 %v499
        %v588 = vunpack.c.l.b16 %v513
        %v589 = vunpack.c.l.b16 %v527
        %v590 = vunpack.c.l.b16 %v541
        %v591 = vunpack.c.l.b16 %v555
        %v592 = vunpack.c.l.b16 %v569
        %v593 = vunpack.c.l.b16 %v583
        %v594 = vpack.c.b16 %v587, %v586
        %v595 = vpack.c.b16 %v589, %v588
        %v596 = vpack.c.b16 %v591, %v590
        %v597 = vpack.c.b16 %v593, %v592
        %vm598 = vcmask 64512
        %v600 = vsel %vm598, %v594, 0
        %v603 = vsel %vm598, %v595, 0
        %v606 = vsel %vm598, %v596, 0
        %v609 = vsel %vm598, %v597, 0
        %vm611 = vcmask 1043456
        %v613 = vsel %vm611, %v585, 0
        %615 = vmatprep.subr.bf16.mxu0 0
        %616 = vmatpush1.bf16.msra.mxu0 %v613
        %617 = vmatprep.subr.bf16.mxu0 0
        %618 = vmatpush1.bf16.msra.mxu0 0
        %619 = vmatprep.subr.bf16.mxu0 0
        %620 = vmatpush1.bf16.msra.mxu0 0
        %621 = vmatprep.subr.bf16.mxu0 0
        %622 = vmatpush1.bf16.msra.mxu0 0
        %623 = vmatprep.subr.bf16.mxu0 0
        %624 = vmatpush1.bf16.msra.mxu0 0
        %625 = vmatprep.subr.bf16.mxu0 0
        %626 = vmatpush1.bf16.msra.mxu0 0
        %627 = vmatprep.subr.bf16.mxu0 0
        %628 = vmatpush1.bf16.msra.mxu0 0
        %629 = vmatprep.subr.bf16.mxu0 0
        %630 = vmatpush1.bf16.msra.mxu0 0
        %631 = vmatprep.subr.bf16.mxu0 0
        %632 = vmatpush1.bf16.msra.mxu0 0
        %633 = vmatprep.subr.bf16.mxu0 0
        %634 = vmatpush1.bf16.msra.mxu0 0
        %635 = vmatprep.subr.bf16.mxu0 0
        %636 = vmatpush1.bf16.msra.mxu0 0
        %637 = vmatprep.subr.bf16.mxu0 0
        %638 = vmatpush1.bf16.msra.mxu0 0
        %639 = vmatprep.subr.bf16.mxu0 0
        %640 = vmatpush1.bf16.msra.mxu0 0
        %641 = vmatprep.subr.bf16.mxu0 0
        %642 = vmatpush1.bf16.msra.mxu0 0
        %643 = vmatprep.subr.bf16.mxu0 0
        %644 = vmatpush1.bf16.msra.mxu0 0
        %645 = vmatprep.subr.bf16.mxu0 0
        %646 = vmatpush1.bf16.msra.mxu0 0
        %647 = vmatprep.mubr.bf16.mxu0 0
        %648 = vmatmul.mubr.bf16.gmra.mrb[0].mxu0 %v600
        %v649 = vpop.f32.mrb[0].mxu0
        %v650 = vadd.f32 0.0, %v649
        %v651 = vpop.f32.mrb[0].mxu0
        %v652 = vpop.f32.mrb[0].mxu0
        %v653 = vadd.f32 0.0, %v652
        %v654 = vpop.f32.mrb[0].mxu0
        %655 = vmatprep.mubr.bf16.mxu0 0
        %656 = vmatmul.mubr.bf16.gmra.mrb[0].mxu0 %v603
        %v657 = vpop.f32.mrb[0].mxu0
        %v658 = vadd.f32 0.0, %v657
        %v659 = vpop.f32.mrb[0].mxu0
        %v660 = vpop.f32.mrb[0].mxu0
        %v661 = vadd.f32 0.0, %v660
        %v662 = vpop.f32.mrb[0].mxu0
        %663 = vmatprep.mubr.bf16.mxu0 0
        %664 = vmatmul.mubr.bf16.gmra.mrb[0].mxu0 %v606
        %v665 = vpop.f32.mrb[0].mxu0
        %v666 = vadd.f32 0.0, %v665
        %v667 = vpop.f32.mrb[0].mxu0
        %v668 = vpop.f32.mrb[0].mxu0
        %v669 = vadd.f32 0.0, %v668
        %v670 = vpop.f32.mrb[0].mxu0
        %671 = vmatprep.mubr.bf16.mxu0 0
        %672 = vmatmul.mubr.bf16.gmra.mrb[0].mxu0 %v609
        %v673 = vpop.f32.mrb[0].mxu0
        %v674 = vadd.f32 0.0, %v673
        %v675 = vpop.f32.mrb[0].mxu0
        %v676 = vpop.f32.mrb[0].mxu0
        %v677 = vadd.f32 0.0, %v676
        %v678 = vpop.f32.mrb[0].mxu0
        %679 = vdwg.mxu0
        %v688 = vunpack.c.l.b16 %v452
        %v689 = vunpack.c.l.b16 %v453
        %v690 = vunpack.c.l.b16 %v454
        %v691 = vunpack.c.l.b16 %v455
        %v692 = vunpack.c.l.b16 %v456
        %v693 = vunpack.c.l.b16 %v457
        %v694 = vunpack.c.l.b16 %v458
        %v695 = vunpack.c.l.b16 %v459
        %v696 = vpack.c.b16 %v689, %v688
        %v697 = vpack.c.b16 %v691, %v690
        %v698 = vpack.c.b16 %v693, %v692
        %v699 = vpack.c.b16 %v695, %v694
        %v701 = vsel %vm598, %v696, 0
        %v704 = vsel %vm598, %v697, 0
        %v707 = vsel %vm598, %v698, 0
        %v710 = vsel %vm598, %v699, 0
        %v713 = vsel %vm611, %v460, 0
        %715 = vmatprep.subr.bf16.mxu0 0
        %716 = vmatpush1.bf16.msra.mxu0 %v713
        %717 = vmatprep.subr.bf16.mxu0 0
        %718 = vmatpush1.bf16.msra.mxu0 0
        %719 = vmatprep.subr.bf16.mxu0 0
        %720 = vmatpush1.bf16.msra.mxu0 0
        %721 = vmatprep.subr.bf16.mxu0 0
        %722 = vmatpush1.bf16.msra.mxu0 0
        %723 = vmatprep.subr.bf16.mxu0 0
        %724 = vmatpush1.bf16.msra.mxu0 0
        %725 = vmatprep.subr.bf16.mxu0 0
        %726 = vmatpush1.bf16.msra.mxu0 0
        %727 = vmatprep.subr.bf16.mxu0 0
        %728 = vmatpush1.bf16.msra.mxu0 0
        %729 = vmatprep.subr.bf16.mxu0 0
        %730 = vmatpush1.bf16.msra.mxu0 0
        %731 = vmatprep.subr.bf16.mxu0 0
        %732 = vmatpush1.bf16.msra.mxu0 0
        %733 = vmatprep.subr.bf16.mxu0 0
        %734 = vmatpush1.bf16.msra.mxu0 0
        %735 = vmatprep.subr.bf16.mxu0 0
        %736 = vmatpush1.bf16.msra.mxu0 0
        %737 = vmatprep.subr.bf16.mxu0 0
        %738 = vmatpush1.bf16.msra.mxu0 0
        %739 = vmatprep.subr.bf16.mxu0 0
        %740 = vmatpush1.bf16.msra.mxu0 0
        %741 = vmatprep.subr.bf16.mxu0 0
        %742 = vmatpush1.bf16.msra.mxu0 0
        %743 = vmatprep.subr.bf16.mxu0 0
        %744 = vmatpush1.bf16.msra.mxu0 0
        %745 = vmatprep.subr.bf16.mxu0 0
        %746 = vmatpush1.bf16.msra.mxu0 0
        %747 = vmatprep.mubr.bf16.mxu0 0
        %748 = vmatmul.mubr.bf16.gmra.mrb[0].mxu0 %v701
        %v749 = vpop.f32.mrb[0].mxu0
        %v750 = vadd.f32 %v650, %v749
        %v751 = vpop.f32.mrb[0].mxu0
        %v752 = vpop.f32.mrb[0].mxu0
        %v753 = vadd.f32 %v653, %v752
        %v754 = vpop.f32.mrb[0].mxu0
        %755 = vmatprep.mubr.bf16.mxu0 0
        %756 = vmatmul.mubr.bf16.gmra.mrb[0].mxu0 %v704
        %v757 = vpop.f32.mrb[0].mxu0
        %v758 = vadd.f32 %v658, %v757
        %v759 = vpop.f32.mrb[0].mxu0
        %v760 = vpop.f32.mrb[0].mxu0
        %v761 = vadd.f32 %v661, %v760
        %v762 = vpop.f32.mrb[0].mxu0
        %763 = vmatprep.mubr.bf16.mxu0 0
        %764 = vmatmul.mubr.bf16.gmra.mrb[0].mxu0 %v707
        %v765 = vpop.f32.mrb[0].mxu0
        %v766 = vadd.f32 %v666, %v765
        %v767 = vpop.f32.mrb[0].mxu0
        %v768 = vpop.f32.mrb[0].mxu0
        %v769 = vadd.f32 %v669, %v768
        %v770 = vpop.f32.mrb[0].mxu0
        %771 = vmatprep.mubr.bf16.mxu0 0
        %772 = vmatmul.mubr.bf16.gmra.mrb[0].mxu0 %v710
        %v773 = vpop.f32.mrb[0].mxu0
        %v774 = vadd.f32 %v674, %v773
        %v775 = vpop.f32.mrb[0].mxu0
        %v776 = vpop.f32.mrb[0].mxu0
        %v777 = vadd.f32 %v677, %v776
        %v778 = vpop.f32.mrb[0].mxu0
        %779 = vdwg.mxu0
        %v780 = vld [vmem:[#allocation2] sm:$0xe]
        %v781 = vld [vmem:[#allocation2 + $0x8] sm:$0xe]
        %v782 = vld [vmem:[#allocation2 + $0x10] sm:$0xe]
        %v783 = vld [vmem:[#allocation2 + $0x18] sm:$0xe]
        %v784 = vld [vmem:[#allocation2 + $0x20] sm:$0xe]
        %v785 = vld [vmem:[#allocation2 + $0x28] sm:$0xe]
        %v786 = vld [vmem:[#allocation2 + $0x30] sm:$0xe]
        %v787 = vld [vmem:[#allocation2 + $0x38] sm:$0xe]
        %vm804 = vcmask 1042432
        %vm805 = vcmask 1046532
        %vm806 = vmor %vm804, %vm805
        %v807 = vrot.slane %v780, 5
        %v808 = vrot.slane %v807, 4
        %v809 = vrot.slane %v461, 5
        %v810 = vsel %vm806, %v808, %v809
        %v811 = vrot.slane %v781, 5
        %v812 = vrot.slane %v811, 4
        %v813 = vrot.slane %v462, 5
        %v814 = vsel %vm806, %v812, %v813
        %v815 = vrot.slane %v782, 5
        %v816 = vrot.slane %v815, 4
        %v817 = vrot.slane %v463, 5
        %v818 = vsel %vm806, %v816, %v817
        %v819 = vrot.slane %v783, 5
        %v820 = vrot.slane %v819, 4
        %v821 = vrot.slane %v464, 5
        %v822 = vsel %vm806, %v820, %v821
        %v823 = vrot.slane %v784, 5
        %v824 = vrot.slane %v823, 4
        %v825 = vrot.slane %v465, 5
        %v826 = vsel %vm806, %v824, %v825
        %v827 = vrot.slane %v785, 5
        %v828 = vrot.slane %v827, 4
        %v829 = vrot.slane %v466, 5
        %v830 = vsel %vm806, %v828, %v829
        %v831 = vrot.slane %v786, 5
        %v832 = vrot.slane %v831, 4
        %v833 = vrot.slane %v467, 5
        %v834 = vsel %vm806, %v832, %v833
        %v835 = vrot.slane %v787, 5
        %v836 = vrot.slane %v835, 4
        %v837 = vrot.slane %v468, 5
        %v838 = vsel %vm806, %v836, %v837
        %s839 = scalar_lea.vmem [#allocation6], 8
        %v840 = vld [vmem:[%s839] sm:$0xf]
        %v841 = vunpack.c.l.b16 %v810
        %v842 = vunpack.c.l.b16 %v814
        %v843 = vunpack.c.l.b16 %v818
        %v844 = vunpack.c.l.b16 %v822
        %v845 = vunpack.c.l.b16 %v826
        %v846 = vunpack.c.l.b16 %v830
        %v847 = vunpack.c.l.b16 %v834
        %v848 = vunpack.c.l.b16 %v838
        %v849 = vpack.c.b16 %v842, %v841
        %v850 = vpack.c.b16 %v844, %v843
        %v851 = vpack.c.b16 %v846, %v845
        %v852 = vpack.c.b16 %v848, %v847
        %v854 = vsel %vm598, %v849, 0
        %v857 = vsel %vm598, %v850, 0
        %v860 = vsel %vm598, %v851, 0
        %v863 = vsel %vm598, %v852, 0
        %v866 = vsel %vm611, %v840, 0
        %868 = vmatprep.subr.bf16.mxu0 0
        %869 = vmatpush1.bf16.msra.mxu0 %v866
        %870 = vmatprep.subr.bf16.mxu0 0
        %871 = vmatpush1.bf16.msra.mxu0 0
        %872 = vmatprep.subr.bf16.mxu0 0
        %873 = vmatpush1.bf16.msra.mxu0 0
        %874 = vmatprep.subr.bf16.mxu0 0
        %875 = vmatpush1.bf16.msra.mxu0 0
        %876 = vmatprep.subr.bf16.mxu0 0
        %877 = vmatpush1.bf16.msra.mxu0 0
        %878 = vmatprep.subr.bf16.mxu0 0
        %879 = vmatpush1.bf16.msra.mxu0 0
        %880 = vmatprep.subr.bf16.mxu0 0
        %881 = vmatpush1.bf16.msra.mxu0 0
        %882 = vmatprep.subr.bf16.mxu0 0
        %883 = vmatpush1.bf16.msra.mxu0 0
        %884 = vmatprep.subr.bf16.mxu0 0
        %885 = vmatpush1.bf16.msra.mxu0 0
        %886 = vmatprep.subr.bf16.mxu0 0
        %887 = vmatpush1.bf16.msra.mxu0 0
        %888 = vmatprep.subr.bf16.mxu0 0
        %889 = vmatpush1.bf16.msra.mxu0 0
        %890 = vmatprep.subr.bf16.mxu0 0
        %891 = vmatpush1.bf16.msra.mxu0 0
        %892 = vmatprep.subr.bf16.mxu0 0
        %893 = vmatpush1.bf16.msra.mxu0 0
        %894 = vmatprep.subr.bf16.mxu0 0
        %895 = vmatpush1.bf16.msra.mxu0 0
        %896 = vmatprep.subr.bf16.mxu0 0
        %897 = vmatpush1.bf16.msra.mxu0 0
        %898 = vmatprep.subr.bf16.mxu0 0
        %899 = vmatpush1.bf16.msra.mxu0 0
        %900 = vmatprep.mubr.bf16.mxu0 0
        %901 = vmatmul.mubr.bf16.gmra.mrb[0].mxu0 %v854
        %v902 = vpop.f32.mrb[0].mxu0
        %v903 = vadd.f32 0.0, %v902
        %v904 = vpop.f32.mrb[0].mxu0
        %v905 = vpop.f32.mrb[0].mxu0
        %v906 = vadd.f32 0.0, %v905
        %v907 = vpop.f32.mrb[0].mxu0
        %908 = vmatprep.mubr.bf16.mxu0 0
        %909 = vmatmul.mubr.bf16.gmra.mrb[0].mxu0 %v857
        %v910 = vpop.f32.mrb[0].mxu0
        %v911 = vadd.f32 0.0, %v910
        %v912 = vpop.f32.mrb[0].mxu0
        %v913 = vpop.f32.mrb[0].mxu0
        %v914 = vadd.f32 0.0, %v913
        %v915 = vpop.f32.mrb[0].mxu0
        %916 = vmatprep.mubr.bf16.mxu0 0
        %917 = vmatmul.mubr.bf16.gmra.mrb[0].mxu0 %v860
        %v918 = vpop.f32.mrb[0].mxu0
        %v919 = vadd.f32 0.0, %v918
        %v920 = vpop.f32.mrb[0].mxu0
        %v921 = vpop.f32.mrb[0].mxu0
        %v922 = vadd.f32 0.0, %v921
        %v923 = vpop.f32.mrb[0].mxu0
        %924 = vmatprep.mubr.bf16.mxu0 0
        %925 = vmatmul.mubr.bf16.gmra.mrb[0].mxu0 %v863
        %v926 = vpop.f32.mrb[0].mxu0
        %v927 = vadd.f32 0.0, %v926
        %v928 = vpop.f32.mrb[0].mxu0
        %v929 = vpop.f32.mrb[0].mxu0
        %v930 = vadd.f32 0.0, %v929
        %v931 = vpop.f32.mrb[0].mxu0
        %932 = vdwg.mxu0
        %v933 = vadd.f32 %v750, %v903
        %v934 = vadd.f32 %v753, %v906
        %v935 = vadd.f32 %v758, %v911
        %v936 = vadd.f32 %v761, %v914
        %v937 = vadd.f32 %v766, %v919
        %v938 = vadd.f32 %v769, %v922
        %v939 = vadd.f32 %v774, %v927
        %v940 = vadd.f32 %v777, %v930
        %v941 = vld [vmem:[%s400] sm:$0xf]
        %v942 = vld [vmem:[%s400 + $0x8] sm:$0xf]
        %v943 = vld [vmem:[%s400 + $0x10] sm:$0xf]
        %v944 = vld [vmem:[%s400 + $0x18] sm:$0xf]
        %v945 = vld [vmem:[%s400 + $0x20] sm:$0xf]
        %v946 = vld [vmem:[%s400 + $0x28] sm:$0xf]
        %v947 = vld [vmem:[%s400 + $0x30] sm:$0xf]
        %v948 = vld [vmem:[%s400 + $0x38] sm:$0xf]
        %s949 = scalar_lea.vmem [#allocation6], 12
        %v950 = vld [vmem:[%s949] sm:$0xf]
        %v959 = vunpack.c.l.b16 %v941
        %v960 = vunpack.c.l.b16 %v942
        %v961 = vunpack.c.l.b16 %v943
        %v962 = vunpack.c.l.b16 %v944
        %v963 = vunpack.c.l.b16 %v945
        %v964 = vunpack.c.l.b16 %v946
        %v965 = vunpack.c.l.b16 %v947
        %v966 = vunpack.c.l.b16 %v948
        %v967 = vpack.c.b16 %v960, %v959
        %v968 = vpack.c.b16 %v962, %v961
        %v969 = vpack.c.b16 %v964, %v963
        %v970 = vpack.c.b16 %v966, %v965
        %v972 = vsel %vm598, %v967, 0
        %v975 = vsel %vm598, %v968, 0
        %v978 = vsel %vm598, %v969, 0
        %v981 = vsel %vm598, %v970, 0
        %v984 = vsel %vm611, %v950, 0
        %986 = vmatprep.subr.bf16.mxu0 0
        %987 = vmatpush1.bf16.msra.mxu0 %v984
        %988 = vmatprep.subr.bf16.mxu0 0
        %989 = vmatpush1.bf16.msra.mxu0 0
        %990 = vmatprep.subr.bf16.mxu0 0
        %991 = vmatpush1.bf16.msra.mxu0 0
        %992 = vmatprep.subr.bf16.mxu0 0
        %993 = vmatpush1.bf16.msra.mxu0 0
        %994 = vmatprep.subr.bf16.mxu0 0
        %995 = vmatpush1.bf16.msra.mxu0 0
        %996 = vmatprep.subr.bf16.mxu0 0
        %997 = vmatpush1.bf16.msra.mxu0 0
        %998 = vmatprep.subr.bf16.mxu0 0
        %999 = vmatpush1.bf16.msra.mxu0 0
        %1000 = vmatprep.subr.bf16.mxu0 0
        %1001 = vmatpush1.bf16.msra.mxu0 0
        %1002 = vmatprep.subr.bf16.mxu0 0
        %1003 = vmatpush1.bf16.msra.mxu0 0
        %1004 = vmatprep.subr.bf16.mxu0 0
        %1005 = vmatpush1.bf16.msra.mxu0 0
        %1006 = vmatprep.subr.bf16.mxu0 0
        %1007 = vmatpush1.bf16.msra.mxu0 0
        %1008 = vmatprep.subr.bf16.mxu0 0
        %1009 = vmatpush1.bf16.msra.mxu0 0
        %1010 = vmatprep.subr.bf16.mxu0 0
        %1011 = vmatpush1.bf16.msra.mxu0 0
        %1012 = vmatprep.subr.bf16.mxu0 0
        %1013 = vmatpush1.bf16.msra.mxu0 0
        %1014 = vmatprep.subr.bf16.mxu0 0
        %1015 = vmatpush1.bf16.msra.mxu0 0
        %1016 = vmatprep.subr.bf16.mxu0 0
        %1017 = vmatpush1.bf16.msra.mxu0 0
        %1018 = vmatprep.mubr.bf16.mxu0 0
        %1019 = vmatmul.mubr.bf16.gmra.mrb[0].mxu0 %v972
        %v1020 = vpop.f32.mrb[0].mxu0
        %v1021 = vadd.f32 0.0, %v1020
        %v1022 = vpop.f32.mrb[0].mxu0
        %v1023 = vpop.f32.mrb[0].mxu0
        %v1024 = vadd.f32 0.0, %v1023
        %v1025 = vpop.f32.mrb[0].mxu0
        %1026 = vmatprep.mubr.bf16.mxu0 0
        %1027 = vmatmul.mubr.bf16.gmra.mrb[0].mxu0 %v975
        %v1028 = vpop.f32.mrb[0].mxu0
        %v1029 = vadd.f32 0.0, %v1028
        %v1030 = vpop.f32.mrb[0].mxu0
        %v1031 = vpop.f32.mrb[0].mxu0
        %v1032 = vadd.f32 0.0, %v1031
        %v1033 = vpop.f32.mrb[0].mxu0
        %1034 = vmatprep.mubr.bf16.mxu0 0
        %1035 = vmatmul.mubr.bf16.gmra.mrb[0].mxu0 %v978
        %v1036 = vpop.f32.mrb[0].mxu0
        %v1037 = vadd.f32 0.0, %v1036
        %v1038 = vpop.f32.mrb[0].mxu0
        %v1039 = vpop.f32.mrb[0].mxu0
        %v1040 = vadd.f32 0.0, %v1039
        %v1041 = vpop.f32.mrb[0].mxu0
        %1042 = vmatprep.mubr.bf16.mxu0 0
        %1043 = vmatmul.mubr.bf16.gmra.mrb[0].mxu0 %v981
        %v1044 = vpop.f32.mrb[0].mxu0
        %v1045 = vadd.f32 0.0, %v1044
        %v1046 = vpop.f32.mrb[0].mxu0
        %v1047 = vpop.f32.mrb[0].mxu0
        %v1048 = vadd.f32 0.0, %v1047
        %v1049 = vpop.f32.mrb[0].mxu0
        %1050 = vdwg.mxu0
        %v1051 = vadd.f32 %v933, %v1021
        %v1052 = vadd.f32 %v934, %v1024
        %v1053 = vadd.f32 %v935, %v1029
        %v1054 = vadd.f32 %v936, %v1032
        %v1055 = vadd.f32 %v937, %v1037
        %v1056 = vadd.f32 %v938, %v1040
        %v1057 = vadd.f32 %v939, %v1045
        %v1058 = vadd.f32 %v940, %v1048
        %v1059 = vld [vmem:[%s400] sm:$0xf]
        %v1060 = vld [vmem:[%s400 + $0x4] sm:$0x1]
        %v1061 = vld [vmem:[%s400 + $0x8] sm:$0xf]
        %v1062 = vld [vmem:[%s400 + $0xc] sm:$0x1]
        %v1063 = vld [vmem:[%s400 + $0x10] sm:$0xf]
        %v1064 = vld [vmem:[%s400 + $0x14] sm:$0x1]
        %v1065 = vld [vmem:[%s400 + $0x18] sm:$0xf]
        %v1066 = vld [vmem:[%s400 + $0x1c] sm:$0x1]
        %v1067 = vld [vmem:[%s400 + $0x20] sm:$0xf]
        %v1068 = vld [vmem:[%s400 + $0x24] sm:$0x1]
        %v1069 = vld [vmem:[%s400 + $0x28] sm:$0xf]
        %v1070 = vld [vmem:[%s400 + $0x2c] sm:$0x1]
        %v1071 = vld [vmem:[%s400 + $0x30] sm:$0xf]
        %v1072 = vld [vmem:[%s400 + $0x34] sm:$0x1]
        %v1073 = vld [vmem:[%s400 + $0x38] sm:$0xf]
        %v1074 = vld [vmem:[%s400 + $0x3c] sm:$0x1]
        %v1076 = vshrl.u32 %v1059, 16
        %v1078 = vrot.slane %v1076, 4
        %v1079 = vshll.u32 %v1059, 16
        %v1081 = vrot.slane %v1079, 5
        %v1082 = vor.u32 %v1078, %v1081
        %v1083 = vrot.slane %v1082, 4
        %v1085 = vshll.u32 %v1060, 16
        %v1087 = vrot.slane %v1085, 5
        %v1088 = vsel %vm471, %v1083, %v1087
        %v1090 = vshrl.u32 %v1061, 16
        %v1092 = vrot.slane %v1090, 4
        %v1093 = vshll.u32 %v1061, 16
        %v1095 = vrot.slane %v1093, 5
        %v1096 = vor.u32 %v1092, %v1095
        %v1097 = vrot.slane %v1096, 4
        %v1099 = vshll.u32 %v1062, 16
        %v1101 = vrot.slane %v1099, 5
        %v1102 = vsel %vm471, %v1097, %v1101
        %v1104 = vshrl.u32 %v1063, 16
        %v1106 = vrot.slane %v1104, 4
        %v1107 = vshll.u32 %v1063, 16
        %v1109 = vrot.slane %v1107, 5
        %v1110 = vor.u32 %v1106, %v1109
        %v1111 = vrot.slane %v1110, 4
        %v1113 = vshll.u32 %v1064, 16
        %v1115 = vrot.slane %v1113, 5
        %v1116 = vsel %vm471, %v1111, %v1115
        %v1118 = vshrl.u32 %v1065, 16
        %v1120 = vrot.slane %v1118, 4
        %v1121 = vshll.u32 %v1065, 16
        %v1123 = vrot.slane %v1121, 5
        %v1124 = vor.u32 %v1120, %v1123
        %v1125 = vrot.slane %v1124, 4
        %v1127 = vshll.u32 %v1066, 16
        %v1129 = vrot.slane %v1127, 5
        %v1130 = vsel %vm471, %v1125, %v1129
        %v1132 = vshrl.u32 %v1067, 16
        %v1134 = vrot.slane %v1132, 4
        %v1135 = vshll.u32 %v1067, 16
        %v1137 = vrot.slane %v1135, 5
        %v1138 = vor.u32 %v1134, %v1137
        %v1139 = vrot.slane %v1138, 4
        %v1141 = vshll.u32 %v1068, 16
        %v1143 = vrot.slane %v1141, 5
        %v1144 = vsel %vm471, %v1139, %v1143
        %v1146 = vshrl.u32 %v1069, 16
        %v1148 = vrot.slane %v1146, 4
        %v1149 = vshll.u32 %v1069, 16
        %v1151 = vrot.slane %v1149, 5
        %v1152 = vor.u32 %v1148, %v1151
        %v1153 = vrot.slane %v1152, 4
        %v1155 = vshll.u32 %v1070, 16
        %v1157 = vrot.slane %v1155, 5
        %v1158 = vsel %vm471, %v1153, %v1157
        %v1160 = vshrl.u32 %v1071, 16
        %v1162 = vrot.slane %v1160, 4
        %v1163 = vshll.u32 %v1071, 16
        %v1165 = vrot.slane %v1163, 5
        %v1166 = vor.u32 %v1162, %v1165
        %v1167 = vrot.slane %v1166, 4
        %v1169 = vshll.u32 %v1072, 16
        %v1171 = vrot.slane %v1169, 5
        %v1172 = vsel %vm471, %v1167, %v1171
        %v1174 = vshrl.u32 %v1073, 16
        %v1176 = vrot.slane %v1174, 4
        %v1177 = vshll.u32 %v1073, 16
        %v1179 = vrot.slane %v1177, 5
        %v1180 = vor.u32 %v1176, %v1179
        %v1181 = vrot.slane %v1180, 4
        %v1183 = vshll.u32 %v1074, 16
        %v1185 = vrot.slane %v1183, 5
        %v1186 = vsel %vm471, %v1181, %v1185
        %s1187 = scalar_lea.vmem [#allocation6], 16
        %v1188 = vld [vmem:[%s1187] sm:$0xf]
        %v1189 = vunpack.c.l.b16 %v1088
        %v1190 = vunpack.c.l.b16 %v1102
        %v1191 = vunpack.c.l.b16 %v1116
        %v1192 = vunpack.c.l.b16 %v1130
        %v1193 = vunpack.c.l.b16 %v1144
        %v1194 = vunpack.c.l.b16 %v1158
        %v1195 = vunpack.c.l.b16 %v1172
        %v1196 = vunpack.c.l.b16 %v1186
        %v1197 = vpack.c.b16 %v1190, %v1189
        %v1198 = vpack.c.b16 %v1192, %v1191
        %v1199 = vpack.c.b16 %v1194, %v1193
        %v1200 = vpack.c.b16 %v1196, %v1195
        %v1202 = vsel %vm598, %v1197, 0
        %v1205 = vsel %vm598, %v1198, 0
        %v1208 = vsel %vm598, %v1199, 0
        %v1211 = vsel %vm598, %v1200, 0
        %v1214 = vsel %vm611, %v1188, 0
        %1216 = vmatprep.subr.bf16.mxu0 0
        %1217 = vmatpush1.bf16.msra.mxu0 %v1214
        %1218 = vmatprep.subr.bf16.mxu0 0
        %1219 = vmatpush1.bf16.msra.mxu0 0
        %1220 = vmatprep.subr.bf16.mxu0 0
        %1221 = vmatpush1.bf16.msra.mxu0 0
        %1222 = vmatprep.subr.bf16.mxu0 0
        %1223 = vmatpush1.bf16.msra.mxu0 0
        %1224 = vmatprep.subr.bf16.mxu0 0
        %1225 = vmatpush1.bf16.msra.mxu0 0
        %1226 = vmatprep.subr.bf16.mxu0 0
        %1227 = vmatpush1.bf16.msra.mxu0 0
        %1228 = vmatprep.subr.bf16.mxu0 0
        %1229 = vmatpush1.bf16.msra.mxu0 0
        %1230 = vmatprep.subr.bf16.mxu0 0
        %1231 = vmatpush1.bf16.msra.mxu0 0
        %1232 = vmatprep.subr.bf16.mxu0 0
        %1233 = vmatpush1.bf16.msra.mxu0 0
        %1234 = vmatprep.subr.bf16.mxu0 0
        %1235 = vmatpush1.bf16.msra.mxu0 0
        %1236 = vmatprep.subr.bf16.mxu0 0
        %1237 = vmatpush1.bf16.msra.mxu0 0
        %1238 = vmatprep.subr.bf16.mxu0 0
        %1239 = vmatpush1.bf16.msra.mxu0 0
        %1240 = vmatprep.subr.bf16.mxu0 0
        %1241 = vmatpush1.bf16.msra.mxu0 0
        %1242 = vmatprep.subr.bf16.mxu0 0
        %1243 = vmatpush1.bf16.msra.mxu0 0
        %1244 = vmatprep.subr.bf16.mxu0 0
        %1245 = vmatpush1.bf16.msra.mxu0 0
        %1246 = vmatprep.subr.bf16.mxu0 0
        %1247 = vmatpush1.bf16.msra.mxu0 0
        %1248 = vmatprep.mubr.bf16.mxu0 0
        %1249 = vmatmul.mubr.bf16.gmra.mrb[0].mxu0 %v1202
        %v1250 = vpop.f32.mrb[0].mxu0
        %v1251 = vadd.f32 0.0, %v1250
        %v1252 = vpop.f32.mrb[0].mxu0
        %v1253 = vpop.f32.mrb[0].mxu0
        %v1254 = vadd.f32 0.0, %v1253
        %v1255 = vpop.f32.mrb[0].mxu0
        %1256 = vmatprep.mubr.bf16.mxu0 0
        %1257 = vmatmul.mubr.bf16.gmra.mrb[0].mxu0 %v1205
        %v1258 = vpop.f32.mrb[0].mxu0
        %v1259 = vadd.f32 0.0, %v1258
        %v1260 = vpop.f32.mrb[0].mxu0
        %v1261 = vpop.f32.mrb[0].mxu0
        %v1262 = vadd.f32 0.0, %v1261
        %v1263 = vpop.f32.mrb[0].mxu0
        %1264 = vmatprep.mubr.bf16.mxu0 0
        %1265 = vmatmul.mubr.bf16.gmra.mrb[0].mxu0 %v1208
        %v1266 = vpop.f32.mrb[0].mxu0
        %v1267 = vadd.f32 0.0, %v1266
        %v1268 = vpop.f32.mrb[0].mxu0
        %v1269 = vpop.f32.mrb[0].mxu0
        %v1270 = vadd.f32 0.0, %v1269
        %v1271 = vpop.f32.mrb[0].mxu0
        %1272 = vmatprep.mubr.bf16.mxu0 0
        %1273 = vmatmul.mubr.bf16.gmra.mrb[0].mxu0 %v1211
        %v1274 = vpop.f32.mrb[0].mxu0
        %v1275 = vadd.f32 0.0, %v1274
        %v1276 = vpop.f32.mrb[0].mxu0
        %v1277 = vpop.f32.mrb[0].mxu0
        %v1278 = vadd.f32 0.0, %v1277
        %v1279 = vpop.f32.mrb[0].mxu0
        %1280 = vdwg.mxu0
        %v1281 = vadd.f32 %v1051, %v1251
        %v1282 = vadd.f32 %v1052, %v1254
        %v1283 = vadd.f32 %v1053, %v1259
        %v1284 = vadd.f32 %v1054, %v1262
        %v1285 = vadd.f32 %v1055, %v1267
        %v1286 = vadd.f32 %v1056, %v1270
        %v1287 = vadd.f32 %v1057, %v1275
        %v1288 = vadd.f32 %v1058, %v1278
        %v1289 = vld [vmem:[%s400] sm:$0xe]
        %v1290 = vld [vmem:[%s400 + $0x8] sm:$0xe]
        %v1291 = vld [vmem:[%s400 + $0x10] sm:$0xe]
        %v1292 = vld [vmem:[%s400 + $0x18] sm:$0xe]
        %v1293 = vld [vmem:[%s400 + $0x20] sm:$0xe]
        %v1294 = vld [vmem:[%s400 + $0x28] sm:$0xe]
        %v1295 = vld [vmem:[%s400 + $0x30] sm:$0xe]
        %v1296 = vld [vmem:[%s400 + $0x38] sm:$0xe]
        %v1313 = vrot.slane %v1289, 5
        %v1314 = vrot.slane %v1313, 4
        %v1315 = vrot.slane %v1060, 5
        %v1316 = vsel %vm806, %v1314, %v1315
        %v1317 = vrot.slane %v1290, 5
        %v1318 = vrot.slane %v1317, 4
        %v1319 = vrot.slane %v1062, 5
        %v1320 = vsel %vm806, %v1318, %v1319
        %v1321 = vrot.slane %v1291, 5
        %v1322 = vrot.slane %v1321, 4
        %v1323 = vrot.slane %v1064, 5
        %v1324 = vsel %vm806, %v1322, %v1323
        %v1325 = vrot.slane %v1292, 5
        %v1326 = vrot.slane %v1325, 4
        %v1327 = vrot.slane %v1066, 5
        %v1328 = vsel %vm806, %v1326, %v1327
        %v1329 = vrot.slane %v1293, 5
        %v1330 = vrot.slane %v1329, 4
        %v1331 = vrot.slane %v1068, 5
        %v1332 = vsel %vm806, %v1330, %v1331
        %v1333 = vrot.slane %v1294, 5
        %v1334 = vrot.slane %v1333, 4
        %v1335 = vrot.slane %v1070, 5
        %v1336 = vsel %vm806, %v1334, %v1335
        %v1337 = vrot.slane %v1295, 5
        %v1338 = vrot.slane %v1337, 4
        %v1339 = vrot.slane %v1072, 5
        %v1340 = vsel %vm806, %v1338, %v1339
        %v1341 = vrot.slane %v1296, 5
        %v1342 = vrot.slane %v1341, 4
        %v1343 = vrot.slane %v1074, 5
        %v1344 = vsel %vm806, %v1342, %v1343
        %s1345 = scalar_lea.vmem [#allocation6], 20
        %v1346 = vld [vmem:[%s1345] sm:$0xf]
        %v1347 = vunpack.c.l.b16 %v1316
        %v1348 = vunpack.c.l.b16 %v1320
        %v1349 = vunpack.c.l.b16 %v1324
        %v1350 = vunpack.c.l.b16 %v1328
        %v1351 = vunpack.c.l.b16 %v1332
        %v1352 = vunpack.c.l.b16 %v1336
        %v1353 = vunpack.c.l.b16 %v1340
        %v1354 = vunpack.c.l.b16 %v1344
        %v1355 = vpack.c.b16 %v1348, %v1347
        %v1356 = vpack.c.b16 %v1350, %v1349
        %v1357 = vpack.c.b16 %v1352, %v1351
        %v1358 = vpack.c.b16 %v1354, %v1353
        %v1360 = vsel %vm598, %v1355, 0
        %v1363 = vsel %vm598, %v1356, 0
        %v1366 = vsel %vm598, %v1357, 0
        %v1369 = vsel %vm598, %v1358, 0
        %v1372 = vsel %vm611, %v1346, 0
        %1374 = vmatprep.subr.bf16.mxu0 0
        %1375 = vmatpush1.bf16.msra.mxu0 %v1372
        %1376 = vmatprep.subr.bf16.mxu0 0
        %1377 = vmatpush1.bf16.msra.mxu0 0
        %1378 = vmatprep.subr.bf16.mxu0 0
        %1379 = vmatpush1.bf16.msra.mxu0 0
        %1380 = vmatprep.subr.bf16.mxu0 0
        %1381 = vmatpush1.bf16.msra.mxu0 0
        %1382 = vmatprep.subr.bf16.mxu0 0
        %1383 = vmatpush1.bf16.msra.mxu0 0
        %1384 = vmatprep.subr.bf16.mxu0 0
        %1385 = vmatpush1.bf16.msra.mxu0 0
        %1386 = vmatprep.subr.bf16.mxu0 0
        %1387 = vmatpush1.bf16.msra.mxu0 0
        %1388 = vmatprep.subr.bf16.mxu0 0
        %1389 = vmatpush1.bf16.msra.mxu0 0
        %1390 = vmatprep.subr.bf16.mxu0 0
        %1391 = vmatpush1.bf16.msra.mxu0 0
        %1392 = vmatprep.subr.bf16.mxu0 0
        %1393 = vmatpush1.bf16.msra.mxu0 0
        %1394 = vmatprep.subr.bf16.mxu0 0
        %1395 = vmatpush1.bf16.msra.mxu0 0
        %1396 = vmatprep.subr.bf16.mxu0 0
        %1397 = vmatpush1.bf16.msra.mxu0 0
        %1398 = vmatprep.subr.bf16.mxu0 0
        %1399 = vmatpush1.bf16.msra.mxu0 0
        %1400 = vmatprep.subr.bf16.mxu0 0
        %1401 = vmatpush1.bf16.msra.mxu0 0
        %1402 = vmatprep.subr.bf16.mxu0 0
        %1403 = vmatpush1.bf16.msra.mxu0 0
        %1404 = vmatprep.subr.bf16.mxu0 0
        %1405 = vmatpush1.bf16.msra.mxu0 0
        %1406 = vmatprep.mubr.bf16.mxu0 0
        %1407 = vmatmul.mubr.bf16.gmra.mrb[0].mxu0 %v1360
        %v1408 = vpop.f32.mrb[0].mxu0
        %v1409 = vadd.f32 0.0, %v1408
        %v1410 = vpop.f32.mrb[0].mxu0
        %v1411 = vpop.f32.mrb[0].mxu0
        %v1412 = vadd.f32 0.0, %v1411
        %v1413 = vpop.f32.mrb[0].mxu0
        %1414 = vmatprep.mubr.bf16.mxu0 0
        %1415 = vmatmul.mubr.bf16.gmra.mrb[0].mxu0 %v1363
        %v1416 = vpop.f32.mrb[0].mxu0
        %v1417 = vadd.f32 0.0, %v1416
        %v1418 = vpop.f32.mrb[0].mxu0
        %v1419 = vpop.f32.mrb[0].mxu0
        %v1420 = vadd.f32 0.0, %v1419
        %v1421 = vpop.f32.mrb[0].mxu0
        %1422 = vmatprep.mubr.bf16.mxu0 0
        %1423 = vmatmul.mubr.bf16.gmra.mrb[0].mxu0 %v1366
        %v1424 = vpop.f32.mrb[0].mxu0
        %v1425 = vadd.f32 0.0, %v1424
        %v1426 = vpop.f32.mrb[0].mxu0
        %v1427 = vpop.f32.mrb[0].mxu0
        %v1428 = vadd.f32 0.0, %v1427
        %v1429 = vpop.f32.mrb[0].mxu0
        %1430 = vmatprep.mubr.bf16.mxu0 0
        %1431 = vmatmul.mubr.bf16.gmra.mrb[0].mxu0 %v1369
        %v1432 = vpop.f32.mrb[0].mxu0
        %v1433 = vadd.f32 0.0, %v1432
        %v1434 = vpop.f32.mrb[0].mxu0
        %v1435 = vpop.f32.mrb[0].mxu0
        %v1436 = vadd.f32 0.0, %v1435
        %v1437 = vpop.f32.mrb[0].mxu0
        %1438 = vdwg.mxu0
        %v1439 = vadd.f32 %v1281, %v1409
        %v1440 = vadd.f32 %v1282, %v1412
        %v1441 = vadd.f32 %v1283, %v1417
        %v1442 = vadd.f32 %v1284, %v1420
        %v1443 = vadd.f32 %v1285, %v1425
        %v1444 = vadd.f32 %v1286, %v1428
        %v1445 = vadd.f32 %v1287, %v1433
        %v1446 = vadd.f32 %v1288, %v1436
        %s1447 = scalar_lea.vmem [#allocation2], 16
        %v1448 = vld [vmem:[%s1447] sm:$0xf]
        %v1449 = vld [vmem:[%s1447 + $0x8] sm:$0xf]
        %v1450 = vld [vmem:[%s1447 + $0x10] sm:$0xf]
        %v1451 = vld [vmem:[%s1447 + $0x18] sm:$0xf]
        %v1452 = vld [vmem:[%s1447 + $0x20] sm:$0xf]
        %v1453 = vld [vmem:[%s1447 + $0x28] sm:$0xf]
        %v1454 = vld [vmem:[%s1447 + $0x30] sm:$0xf]
        %v1455 = vld [vmem:[%s1447 + $0x38] sm:$0xf]
        %s1456 = scalar_lea.vmem [#allocation6], 24
        %v1457 = vld [vmem:[%s1456] sm:$0xf]
        %v1466 = vunpack.c.l.b16 %v1448
        %v1467 = vunpack.c.l.b16 %v1449
        %v1468 = vunpack.c.l.b16 %v1450
        %v1469 = vunpack.c.l.b16 %v1451
        %v1470 = vunpack.c.l.b16 %v1452
        %v1471 = vunpack.c.l.b16 %v1453
        %v1472 = vunpack.c.l.b16 %v1454
        %v1473 = vunpack.c.l.b16 %v1455
        %v1474 = vpack.c.b16 %v1467, %v1466
        %v1475 = vpack.c.b16 %v1469, %v1468
        %v1476 = vpack.c.b16 %v1471, %v1470
        %v1477 = vpack.c.b16 %v1473, %v1472
        %v1479 = vsel %vm598, %v1474, 0
        %v1482 = vsel %vm598, %v1475, 0
        %v1485 = vsel %vm598, %v1476, 0
        %v1488 = vsel %vm598, %v1477, 0
        %v1491 = vsel %vm611, %v1457, 0
        %1493 = vmatprep.subr.bf16.mxu0 0
        %1494 = vmatpush1.bf16.msra.mxu0 %v1491
        %1495 = vmatprep.subr.bf16.mxu0 0
        %1496 = vmatpush1.bf16.msra.mxu0 0
        %1497 = vmatprep.subr.bf16.mxu0 0
        %1498 = vmatpush1.bf16.msra.mxu0 0
        %1499 = vmatprep.subr.bf16.mxu0 0
        %1500 = vmatpush1.bf16.msra.mxu0 0
        %1501 = vmatprep.subr.bf16.mxu0 0
        %1502 = vmatpush1.bf16.msra.mxu0 0
        %1503 = vmatprep.subr.bf16.mxu0 0
        %1504 = vmatpush1.bf16.msra.mxu0 0
        %1505 = vmatprep.subr.bf16.mxu0 0
        %1506 = vmatpush1.bf16.msra.mxu0 0
        %1507 = vmatprep.subr.bf16.mxu0 0
        %1508 = vmatpush1.bf16.msra.mxu0 0
        %1509 = vmatprep.subr.bf16.mxu0 0
        %1510 = vmatpush1.bf16.msra.mxu0 0
        %1511 = vmatprep.subr.bf16.mxu0 0
        %1512 = vmatpush1.bf16.msra.mxu0 0
        %1513 = vmatprep.subr.bf16.mxu0 0
        %1514 = vmatpush1.bf16.msra.mxu0 0
        %1515 = vmatprep.subr.bf16.mxu0 0
        %1516 = vmatpush1.bf16.msra.mxu0 0
        %1517 = vmatprep.subr.bf16.mxu0 0
        %1518 = vmatpush1.bf16.msra.mxu0 0
        %1519 = vmatprep.subr.bf16.mxu0 0
        %1520 = vmatpush1.bf16.msra.mxu0 0
        %1521 = vmatprep.subr.bf16.mxu0 0
        %1522 = vmatpush1.bf16.msra.mxu0 0
        %1523 = vmatprep.subr.bf16.mxu0 0
        %1524 = vmatpush1.bf16.msra.mxu0 0
        %1525 = vmatprep.mubr.bf16.mxu0 0
        %1526 = vmatmul.mubr.bf16.gmra.mrb[0].mxu0 %v1479
        %v1527 = vpop.f32.mrb[0].mxu0
        %v1528 = vadd.f32 0.0, %v1527
        %v1529 = vpop.f32.mrb[0].mxu0
        %v1530 = vpop.f32.mrb[0].mxu0
        %v1531 = vadd.f32 0.0, %v1530
        %v1532 = vpop.f32.mrb[0].mxu0
        %1533 = vmatprep.mubr.bf16.mxu0 0
        %1534 = vmatmul.mubr.bf16.gmra.mrb[0].mxu0 %v1482
        %v1535 = vpop.f32.mrb[0].mxu0
        %v1536 = vadd.f32 0.0, %v1535
        %v1537 = vpop.f32.mrb[0].mxu0
        %v1538 = vpop.f32.mrb[0].mxu0
        %v1539 = vadd.f32 0.0, %v1538
        %v1540 = vpop.f32.mrb[0].mxu0
        %1541 = vmatprep.mubr.bf16.mxu0 0
        %1542 = vmatmul.mubr.bf16.gmra.mrb[0].mxu0 %v1485
        %v1543 = vpop.f32.mrb[0].mxu0
        %v1544 = vadd.f32 0.0, %v1543
        %v1545 = vpop.f32.mrb[0].mxu0
        %v1546 = vpop.f32.mrb[0].mxu0
        %v1547 = vadd.f32 0.0, %v1546
        %v1548 = vpop.f32.mrb[0].mxu0
        %1549 = vmatprep.mubr.bf16.mxu0 0
        %1550 = vmatmul.mubr.bf16.gmra.mrb[0].mxu0 %v1488
        %v1551 = vpop.f32.mrb[0].mxu0
        %v1552 = vadd.f32 0.0, %v1551
        %v1553 = vpop.f32.mrb[0].mxu0
        %v1554 = vpop.f32.mrb[0].mxu0
        %v1555 = vadd.f32 0.0, %v1554
        %v1556 = vpop.f32.mrb[0].mxu0
        %1557 = vdwg.mxu0
        %v1558 = vadd.f32 %v1439, %v1528
        %v1559 = vadd.f32 %v1440, %v1531
        %v1560 = vadd.f32 %v1441, %v1536
        %v1561 = vadd.f32 %v1442, %v1539
        %v1562 = vadd.f32 %v1443, %v1544
        %v1563 = vadd.f32 %v1444, %v1547
        %v1564 = vadd.f32 %v1445, %v1552
        %v1565 = vadd.f32 %v1446, %v1555
        %v1566 = vld [vmem:[%s1447] sm:$0xf]
        %v1567 = vld [vmem:[%s1447 + $0x4] sm:$0x1]
        %v1568 = vld [vmem:[%s1447 + $0x8] sm:$0xf]
        %v1569 = vld [vmem:[%s1447 + $0xc] sm:$0x1]
        %v1570 = vld [vmem:[%s1447 + $0x10] sm:$0xf]
        %v1571 = vld [vmem:[%s1447 + $0x14] sm:$0x1]
        %v1572 = vld [vmem:[%s1447 + $0x18] sm:$0xf]
        %v1573 = vld [vmem:[%s1447 + $0x1c] sm:$0x1]
        %v1574 = vld [vmem:[%s1447 + $0x20] sm:$0xf]
        %v1575 = vld [vmem:[%s1447 + $0x24] sm:$0x1]
        %v1576 = vld [vmem:[%s1447 + $0x28] sm:$0xf]
        %v1577 = vld [vmem:[%s1447 + $0x2c] sm:$0x1]
        %v1578 = vld [vmem:[%s1447 + $0x30] sm:$0xf]
        %v1579 = vld [vmem:[%s1447 + $0x34] sm:$0x1]
        %v1580 = vld [vmem:[%s1447 + $0x38] sm:$0xf]
        %v1581 = vld [vmem:[%s1447 + $0x3c] sm:$0x1]
        %v1583 = vshrl.u32 %v1566, 16
        %v1585 = vrot.slane %v1583, 4
        %v1586 = vshll.u32 %v1566, 16
        %v1588 = vrot.slane %v1586, 5
        %v1589 = vor.u32 %v1585, %v1588
        %v1590 = vrot.slane %v1589, 4
        %v1592 = vshll.u32 %v1567, 16
        %v1594 = vrot.slane %v1592, 5
        %v1595 = vsel %vm471, %v1590, %v1594
        %v1597 = vshrl.u32 %v1568, 16
        %v1599 = vrot.slane %v1597, 4
        %v1600 = vshll.u32 %v1568, 16
        %v1602 = vrot.slane %v1600, 5
        %v1603 = vor.u32 %v1599, %v1602
        %v1604 = vrot.slane %v1603, 4
        %v1606 = vshll.u32 %v1569, 16
        %v1608 = vrot.slane %v1606, 5
        %v1609 = vsel %vm471, %v1604, %v1608
        %v1611 = vshrl.u32 %v1570, 16
        %v1613 = vrot.slane %v1611, 4
        %v1614 = vshll.u32 %v1570, 16
        %v1616 = vrot.slane %v1614, 5
        %v1617 = vor.u32 %v1613, %v1616
        %v1618 = vrot.slane %v1617, 4
        %v1620 = vshll.u32 %v1571, 16
        %v1622 = vrot.slane %v1620, 5
        %v1623 = vsel %vm471, %v1618, %v1622
        %v1625 = vshrl.u32 %v1572, 16
        %v1627 = vrot.slane %v1625, 4
        %v1628 = vshll.u32 %v1572, 16
        %v1630 = vrot.slane %v1628, 5
        %v1631 = vor.u32 %v1627, %v1630
        %v1632 = vrot.slane %v1631, 4
        %v1634 = vshll.u32 %v1573, 16
        %v1636 = vrot.slane %v1634, 5
        %v1637 = vsel %vm471, %v1632, %v1636
        %v1639 = vshrl.u32 %v1574, 16
        %v1641 = vrot.slane %v1639, 4
        %v1642 = vshll.u32 %v1574, 16
        %v1644 = vrot.slane %v1642, 5
        %v1645 = vor.u32 %v1641, %v1644
        %v1646 = vrot.slane %v1645, 4
        %v1648 = vshll.u32 %v1575, 16
        %v1650 = vrot.slane %v1648, 5
        %v1651 = vsel %vm471, %v1646, %v1650
        %v1653 = vshrl.u32 %v1576, 16
        %v1655 = vrot.slane %v1653, 4
        %v1656 = vshll.u32 %v1576, 16
        %v1658 = vrot.slane %v1656, 5
        %v1659 = vor.u32 %v1655, %v1658
        %v1660 = vrot.slane %v1659, 4
        %v1662 = vshll.u32 %v1577, 16
        %v1664 = vrot.slane %v1662, 5
        %v1665 = vsel %vm471, %v1660, %v1664
        %v1667 = vshrl.u32 %v1578, 16
        %v1669 = vrot.slane %v1667, 4
        %v1670 = vshll.u32 %v1578, 16
        %v1672 = vrot.slane %v1670, 5
        %v1673 = vor.u32 %v1669, %v1672
        %v1674 = vrot.slane %v1673, 4
        %v1676 = vshll.u32 %v1579, 16
        %v1678 = vrot.slane %v1676, 5
        %v1679 = vsel %vm471, %v1674, %v1678
        %v1681 = vshrl.u32 %v1580, 16
        %v1683 = vrot.slane %v1681, 4
        %v1684 = vshll.u32 %v1580, 16
        %v1686 = vrot.slane %v1684, 5
        %v1687 = vor.u32 %v1683, %v1686
        %v1688 = vrot.slane %v1687, 4
        %v1690 = vshll.u32 %v1581, 16
        %v1692 = vrot.slane %v1690, 5
        %v1693 = vsel %vm471, %v1688, %v1692
        %s1694 = scalar_lea.vmem [#allocation6], 28
        %v1695 = vld [vmem:[%s1694] sm:$0xf]
        %v1696 = vunpack.c.l.b16 %v1595
        %v1697 = vunpack.c.l.b16 %v1609
        %v1698 = vunpack.c.l.b16 %v1623
        %v1699 = vunpack.c.l.b16 %v1637
        %v1700 = vunpack.c.l.b16 %v1651
        %v1701 = vunpack.c.l.b16 %v1665
        %v1702 = vunpack.c.l.b16 %v1679
        %v1703 = vunpack.c.l.b16 %v1693
        %v1704 = vpack.c.b16 %v1697, %v1696
        %v1705 = vpack.c.b16 %v1699, %v1698
        %v1706 = vpack.c.b16 %v1701, %v1700
        %v1707 = vpack.c.b16 %v1703, %v1702
        %v1709 = vsel %vm598, %v1704, 0
        %v1712 = vsel %vm598, %v1705, 0
        %v1715 = vsel %vm598, %v1706, 0
        %v1718 = vsel %vm598, %v1707, 0
        %v1721 = vsel %vm611, %v1695, 0
        %1723 = vmatprep.subr.bf16.mxu0 0
        %1724 = vmatpush1.bf16.msra.mxu0 %v1721
        %1725 = vmatprep.subr.bf16.mxu0 0
        %1726 = vmatpush1.bf16.msra.mxu0 0
        %1727 = vmatprep.subr.bf16.mxu0 0
        %1728 = vmatpush1.bf16.msra.mxu0 0
        %1729 = vmatprep.subr.bf16.mxu0 0
        %1730 = vmatpush1.bf16.msra.mxu0 0
        %1731 = vmatprep.subr.bf16.mxu0 0
        %1732 = vmatpush1.bf16.msra.mxu0 0
        %1733 = vmatprep.subr.bf16.mxu0 0
        %1734 = vmatpush1.bf16.msra.mxu0 0
        %1735 = vmatprep.subr.bf16.mxu0 0
        %1736 = vmatpush1.bf16.msra.mxu0 0
        %1737 = vmatprep.subr.bf16.mxu0 0
        %1738 = vmatpush1.bf16.msra.mxu0 0
        %1739 = vmatprep.subr.bf16.mxu0 0
        %1740 = vmatpush1.bf16.msra.mxu0 0
        %1741 = vmatprep.subr.bf16.mxu0 0
        %1742 = vmatpush1.bf16.msra.mxu0 0
        %1743 = vmatprep.subr.bf16.mxu0 0
        %1744 = vmatpush1.bf16.msra.mxu0 0
        %1745 = vmatprep.subr.bf16.mxu0 0
        %1746 = vmatpush1.bf16.msra.mxu0 0
        %1747 = vmatprep.subr.bf16.mxu0 0
        %1748 = vmatpush1.bf16.msra.mxu0 0
        %1749 = vmatprep.subr.bf16.mxu0 0
        %1750 = vmatpush1.bf16.msra.mxu0 0
        %1751 = vmatprep.subr.bf16.mxu0 0
        %1752 = vmatpush1.bf16.msra.mxu0 0
        %1753 = vmatprep.subr.bf16.mxu0 0
        %1754 = vmatpush1.bf16.msra.mxu0 0
        %1755 = vmatprep.mubr.bf16.mxu0 0
        %1756 = vmatmul.mubr.bf16.gmra.mrb[0].mxu0 %v1709
        %v1757 = vpop.f32.mrb[0].mxu0
        %v1758 = vadd.f32 0.0, %v1757
        %v1759 = vpop.f32.mrb[0].mxu0
        %v1760 = vpop.f32.mrb[0].mxu0
        %v1761 = vadd.f32 0.0, %v1760
        %v1762 = vpop.f32.mrb[0].mxu0
        %1763 = vmatprep.mubr.bf16.mxu0 0
        %1764 = vmatmul.mubr.bf16.gmra.mrb[0].mxu0 %v1712
        %v1765 = vpop.f32.mrb[0].mxu0
        %v1766 = vadd.f32 0.0, %v1765
        %v1767 = vpop.f32.mrb[0].mxu0
        %v1768 = vpop.f32.mrb[0].mxu0
        %v1769 = vadd.f32 0.0, %v1768
        %v1770 = vpop.f32.mrb[0].mxu0
        %1771 = vmatprep.mubr.bf16.mxu0 0
        %1772 = vmatmul.mubr.bf16.gmra.mrb[0].mxu0 %v1715
        %v1773 = vpop.f32.mrb[0].mxu0
        %v1774 = vadd.f32 0.0, %v1773
        %v1775 = vpop.f32.mrb[0].mxu0
        %v1776 = vpop.f32.mrb[0].mxu0
        %v1777 = vadd.f32 0.0, %v1776
        %v1778 = vpop.f32.mrb[0].mxu0
        %1779 = vmatprep.mubr.bf16.mxu0 0
        %1780 = vmatmul.mubr.bf16.gmra.mrb[0].mxu0 %v1718
        %v1781 = vpop.f32.mrb[0].mxu0
        %v1782 = vadd.f32 0.0, %v1781
        %v1783 = vpop.f32.mrb[0].mxu0
        %v1784 = vpop.f32.mrb[0].mxu0
        %v1785 = vadd.f32 0.0, %v1784
        %v1786 = vpop.f32.mrb[0].mxu0
        %1787 = vdwg.mxu0
        %v1788 = vadd.f32 %v1558, %v1758
        %v1789 = vadd.f32 %v1559, %v1761
        %v1790 = vadd.f32 %v1560, %v1766
        %v1791 = vadd.f32 %v1561, %v1769
        %v1792 = vadd.f32 %v1562, %v1774
        %v1793 = vadd.f32 %v1563, %v1777
        %v1794 = vadd.f32 %v1564, %v1782
        %v1795 = vadd.f32 %v1565, %v1785
        %v1796 = vld [vmem:[%s1447] sm:$0xe]
        %v1797 = vld [vmem:[%s1447 + $0x8] sm:$0xe]
        %v1798 = vld [vmem:[%s1447 + $0x10] sm:$0xe]
        %v1799 = vld [vmem:[%s1447 + $0x18] sm:$0xe]
        %v1800 = vld [vmem:[%s1447 + $0x20] sm:$0xe]
        %v1801 = vld [vmem:[%s1447 + $0x28] sm:$0xe]
        %v1802 = vld [vmem:[%s1447 + $0x30] sm:$0xe]
        %v1803 = vld [vmem:[%s1447 + $0x38] sm:$0xe]
        %v1820 = vrot.slane %v1796, 5
        %v1821 = vrot.slane %v1820, 4
        %v1822 = vrot.slane %v1567, 5
        %v1823 = vsel %vm806, %v1821, %v1822
        %v1824 = vrot.slane %v1797, 5
        %v1825 = vrot.slane %v1824, 4
        %v1826 = vrot.slane %v1569, 5
        %v1827 = vsel %vm806, %v1825, %v1826
        %v1828 = vrot.slane %v1798, 5
        %v1829 = vrot.slane %v1828, 4
        %v1830 = vrot.slane %v1571, 5
        %v1831 = vsel %vm806, %v1829, %v1830
        %v1832 = vrot.slane %v1799, 5
        %v1833 = vrot.slane %v1832, 4
        %v1834 = vrot.slane %v1573, 5
        %v1835 = vsel %vm806, %v1833, %v1834
        %v1836 = vrot.slane %v1800, 5
        %v1837 = vrot.slane %v1836, 4
        %v1838 = vrot.slane %v1575, 5
        %v1839 = vsel %vm806, %v1837, %v1838
        %v1840 = vrot.slane %v1801, 5
        %v1841 = vrot.slane %v1840, 4
        %v1842 = vrot.slane %v1577, 5
        %v1843 = vsel %vm806, %v1841, %v1842
        %v1844 = vrot.slane %v1802, 5
        %v1845 = vrot.slane %v1844, 4
        %v1846 = vrot.slane %v1579, 5
        %v1847 = vsel %vm806, %v1845, %v1846
        %v1848 = vrot.slane %v1803, 5
        %v1849 = vrot.slane %v1848, 4
        %v1850 = vrot.slane %v1581, 5
        %v1851 = vsel %vm806, %v1849, %v1850
        %s1852 = scalar_lea.vmem [#allocation6], 32
        %v1853 = vld [vmem:[%s1852] sm:$0xf]
        %v1854 = vunpack.c.l.b16 %v1823
        %v1855 = vunpack.c.l.b16 %v1827
        %v1856 = vunpack.c.l.b16 %v1831
        %v1857 = vunpack.c.l.b16 %v1835
        %v1858 = vunpack.c.l.b16 %v1839
        %v1859 = vunpack.c.l.b16 %v1843
        %v1860 = vunpack.c.l.b16 %v1847
        %v1861 = vunpack.c.l.b16 %v1851
        %v1862 = vpack.c.b16 %v1855, %v1854
        %v1863 = vpack.c.b16 %v1857, %v1856
        %v1864 = vpack.c.b16 %v1859, %v1858
        %v1865 = vpack.c.b16 %v1861, %v1860
        %v1867 = vsel %vm598, %v1862, 0
        %v1870 = vsel %vm598, %v1863, 0
        %v1873 = vsel %vm598, %v1864, 0
        %v1876 = vsel %vm598, %v1865, 0
        %v1879 = vsel %vm611, %v1853, 0
        %1881 = vmatprep.subr.bf16.mxu0 0
        %1882 = vmatpush1.bf16.msra.mxu0 %v1879
        %1883 = vmatprep.subr.bf16.mxu0 0
        %1884 = vmatpush1.bf16.msra.mxu0 0
        %1885 = vmatprep.subr.bf16.mxu0 0
        %1886 = vmatpush1.bf16.msra.mxu0 0
        %1887 = vmatprep.subr.bf16.mxu0 0
        %1888 = vmatpush1.bf16.msra.mxu0 0
        %1889 = vmatprep.subr.bf16.mxu0 0
        %1890 = vmatpush1.bf16.msra.mxu0 0
        %1891 = vmatprep.subr.bf16.mxu0 0
        %1892 = vmatpush1.bf16.msra.mxu0 0
        %1893 = vmatprep.subr.bf16.mxu0 0
        %1894 = vmatpush1.bf16.msra.mxu0 0
        %1895 = vmatprep.subr.bf16.mxu0 0
        %1896 = vmatpush1.bf16.msra.mxu0 0
        %1897 = vmatprep.subr.bf16.mxu0 0
        %1898 = vmatpush1.bf16.msra.mxu0 0
        %1899 = vmatprep.subr.bf16.mxu0 0
        %1900 = vmatpush1.bf16.msra.mxu0 0
        %1901 = vmatprep.subr.bf16.mxu0 0
        %1902 = vmatpush1.bf16.msra.mxu0 0
        %1903 = vmatprep.subr.bf16.mxu0 0
        %1904 = vmatpush1.bf16.msra.mxu0 0
        %1905 = vmatprep.subr.bf16.mxu0 0
        %1906 = vmatpush1.bf16.msra.mxu0 0
        %1907 = vmatprep.subr.bf16.mxu0 0
        %1908 = vmatpush1.bf16.msra.mxu0 0
        %1909 = vmatprep.subr.bf16.mxu0 0
        %1910 = vmatpush1.bf16.msra.mxu0 0
        %1911 = vmatprep.subr.bf16.mxu0 0
        %1912 = vmatpush1.bf16.msra.mxu0 0
        %1913 = vmatprep.mubr.bf16.mxu0 0
        %1914 = vmatmul.mubr.bf16.gmra.mrb[0].mxu0 %v1867
        %v1915 = vpop.f32.mrb[0].mxu0
        %v1916 = vadd.f32 0.0, %v1915
        %v1917 = vpop.f32.mrb[0].mxu0
        %v1918 = vpop.f32.mrb[0].mxu0
        %v1919 = vadd.f32 0.0, %v1918
        %v1920 = vpop.f32.mrb[0].mxu0
        %1921 = vmatprep.mubr.bf16.mxu0 0
        %1922 = vmatmul.mubr.bf16.gmra.mrb[0].mxu0 %v1870
        %v1923 = vpop.f32.mrb[0].mxu0
        %v1924 = vadd.f32 0.0, %v1923
        %v1925 = vpop.f32.mrb[0].mxu0
        %v1926 = vpop.f32.mrb[0].mxu0
        %v1927 = vadd.f32 0.0, %v1926
        %v1928 = vpop.f32.mrb[0].mxu0
        %1929 = vmatprep.mubr.bf16.mxu0 0
        %1930 = vmatmul.mubr.bf16.gmra.mrb[0].mxu0 %v1873
        %v1931 = vpop.f32.mrb[0].mxu0
        %v1932 = vadd.f32 0.0, %v1931
        %v1933 = vpop.f32.mrb[0].mxu0
        %v1934 = vpop.f32.mrb[0].mxu0
        %v1935 = vadd.f32 0.0, %v1934
        %v1936 = vpop.f32.mrb[0].mxu0
        %1937 = vmatprep.mubr.bf16.mxu0 0
        %1938 = vmatmul.mubr.bf16.gmra.mrb[0].mxu0 %v1876
        %v1939 = vpop.f32.mrb[0].mxu0
        %v1940 = vadd.f32 0.0, %v1939
        %v1941 = vpop.f32.mrb[0].mxu0
        %v1942 = vpop.f32.mrb[0].mxu0
        %v1943 = vadd.f32 0.0, %v1942
        %v1944 = vpop.f32.mrb[0].mxu0
        %1945 = vdwg.mxu0
        %v1946 = vadd.f32 %v1788, %v1916
        %v1947 = vadd.f32 %v1789, %v1919
        %v1948 = vadd.f32 %v1790, %v1924
        %v1949 = vadd.f32 %v1791, %v1927
        %v1950 = vadd.f32 %v1792, %v1932
        %v1951 = vadd.f32 %v1793, %v1935
        %v1952 = vadd.f32 %v1794, %v1940
        %v1953 = vadd.f32 %v1795, %v1943
        %v1955 = vlaneseq
        %v1956 = vshrl.u32 %v1955, 7
        %v1957 = vsub.s32 0, %v1956
        %v1958 = vrot.slane %v451, %v1957
        %v1960 = vadd.f32 %v1946, %v1958
        %v1961 = vadd.f32 %v1947, %v1958
        %v1962 = vadd.f32 %v1948, %v1958
        %v1963 = vadd.f32 %v1949, %v1958
        %v1964 = vadd.f32 %v1950, %v1958
        %v1965 = vadd.f32 %v1951, %v1958
        %v1966 = vadd.f32 %v1952, %v1958
        %v1967 = vadd.f32 %v1953, %v1958
        %v1968 = vmax.f32 %v1960, 0.0
        %v1969 = vmax.f32 %v1961, 0.0
        %v1970 = vmax.f32 %v1962, 0.0
        %v1971 = vmax.f32 %v1963, 0.0
        %v1972 = vmax.f32 %v1964, 0.0
        %v1973 = vmax.f32 %v1965, 0.0
        %v1974 = vmax.f32 %v1966, 0.0
        %v1975 = vmax.f32 %v1967, 0.0
        %v1976 = vpack.c.bf16 %v1969, %v1968
        %v1977 = vpack.c.bf16 %v1971, %v1970
        %v1978 = vpack.c.bf16 %v1973, %v1972
        %v1979 = vpack.c.bf16 %v1975, %v1974
        %v1984 = vunpack.c.l.b16 %v1976
        %v1985 = vunpack.c.h.b16 %v1976
        %v1986 = vunpack.c.l.b16 %v1977
        %v1987 = vunpack.c.h.b16 %v1977
        %v1988 = vunpack.c.l.b16 %v1978
        %v1989 = vunpack.c.h.b16 %v1978
        %v1990 = vunpack.c.l.b16 %v1979
        %v1991 = vunpack.c.h.b16 %v1979
        %v1992 = vpack.c.b16 %v1984, %v1984
        %v1993 = vpack.c.b16 %v1985, %v1985
        %v1994 = vpack.c.b16 %v1986, %v1986
        %v1995 = vpack.c.b16 %v1987, %v1987
        %v1996 = vpack.c.b16 %v1988, %v1988
        %v1997 = vpack.c.b16 %v1989, %v1989
        %v1998 = vpack.c.b16 %v1990, %v1990
        %v1999 = vpack.c.b16 %v1991, %v1991
        %vm2008 = vcmask 125952
        %2009 = vst.msk [vmem:[%s235] sm:$0xf] %vm2008, %v1992
        %2010 = vst.msk [vmem:[%s235 + $0x4] sm:$0xf] %vm2008, %v1993
        %2011 = vst.msk [vmem:[%s235 + $0x8] sm:$0xf] %vm2008, %v1994
        %2012 = vst.msk [vmem:[%s235 + $0xc] sm:$0xf] %vm2008, %v1995
        %2013 = vst.msk [vmem:[%s235 + $0x10] sm:$0xf] %vm2008, %v1996
        %2014 = vst.msk [vmem:[%s235 + $0x14] sm:$0xf] %vm2008, %v1997
        %2015 = vst.msk [vmem:[%s235 + $0x18] sm:$0xf] %vm2008, %v1998
        %2016 = vst.msk [vmem:[%s235 + $0x1c] sm:$0xf] %vm2008, %v1999
        %s2017 = sand.u32 %s121, 1
        %s2018 = scalar_lea.sflag [#allocation5], %s2017
        %s2019 = sand.u32 %s121, 1
        %s2020 = smul.addr %s2019, 32
        %s2021 = scalar_lea.vmem [#allocation8], %s2020
        // Predicated region
        $region41: #{tpu_custom_call.1} parent=31 // pred_check
          %p2022 = pneg %p131
        $region42: #{tpu_custom_call.1} parent=31 // pred_check_branch
          %2024 = sbr.rel (%p2022) target = $region44
        $region43: #{tpu_custom_call.1} parent=31 // pred_region
          %s2026 = ssub.s32 512, 512
          %2027 = vsyncadd %s2018, %s2026
          %s2028 = smul.addr %s25, 8
          %s2029 = sadd.s32 %s26, %s2028
          %s2030 = smul.addr %s2029, 64
          %s2031 = scalar_lea.hbm %s3, %s2030
          %s2032 = sshll.u32 %s2021, 4
          %s2033 = int_to_ptr.vmem [resolvable:$true] %s2032
          %2038 = dma.vmem_to_hbm [thread:$0]  %s2033, 512, %s2031, %s2018, 64, 64, 4
        $region44: #{tpu_custom_call.1} parent=31 // pred_fallthru
          _
      $region32: #{tpu_custom_call.1} parent=5 // pred_fallthru
        _
      %p2039 = scmp.le.s32.totalorder 2, %s16
      // Predicated region
      $region45: #{tpu_custom_call.1} parent=5 // pred_check
        %p2040 = pneg %p2039
      $region46: #{tpu_custom_call.1} parent=5 // pred_check_branch
        %2042 = sbr.rel (%p2040) target = $region48
      $region47: #{tpu_custom_call.1} parent=5 // pred_region
        %s2043 = ssub.s32 %s16, 2
        // Predicated region
        $region49: #{tpu_custom_call.1} parent=47 // pred_check
          %p2044 = pneg %p137
        $region50: #{tpu_custom_call.1} parent=47 // pred_check_branch
          %2046 = sbr.rel (%p2044) target = $region52
        $region51: #{tpu_custom_call.1} parent=47 // pred_region
          %s2047 = sand.u32 %s122, 1
          %s2048 = scalar_lea.sflag [#allocation5], %s2047
          %s2049 = sand.u32 %s122, 1
          %s2050 = smul.addr %s2049, 32
          %s2051 = scalar_lea.vmem [#allocation8], %s2050
          %2052 = dma.done %s2048, 512
        $region52: #{tpu_custom_call.1} parent=47 // pred_fallthru
          _
      $region48: #{tpu_custom_call.1} parent=5 // pred_fallthru
        _
    $region6: #{tpu_custom_call.1} parent=1 // loop_footer
      %s20 = sadd.s32 1, %s16
    $region7: #{tpu_custom_call.1} parent=1 // loop_footer_branch
      %15 = sbr.rel target = $region3
    $region8: #{tpu_custom_call.1} parent=1 // loop_exit
      _
    %2053 = vsyncpa [#allocation4], 1
    %s2054 = scalar_lea.sflag [#allocation4], 1
    %2055 = vsyncpa %s2054, 1
    %2056 = vsyncpa [#allocation7], 1
    %2057 = vsyncpa [#allocation5], 1
    %s2058 = scalar_lea.sflag [#allocation5], 1
    %2059 = vsyncpa %s2058, 1

</llo_original>
